<compile_context>
chip_gen: v5e
topology: v5e:2x2
jax: 0.10.0
libtpu: 0.0.40
codegen_flags: <defaults>
</compile_context>

<pallas_src>
import functools

import jax
import jax.numpy as jnp
from jax.experimental import pallas as pl
from jax.experimental.pallas import tpu as pltpu

N_LAYERS = 8
LANE = 128
TM_MAX = 256          # MXU row count on v6e/v7x; also fine on v5e


# ----------------------------------------------------------------------------
# Pallas kernel: fully fused 8-layer MLP, batch-tiled, VMEM-resident weights.
# ----------------------------------------------------------------------------
def _mlp_kernel(*refs):
    # refs = (x, w1..w8, bias_slab, out)
    x_ref = refs[0]
    w_refs = refs[1:1 + N_LAYERS]
    b_ref = refs[1 + N_LAYERS]          # (8, 512) f32, row per layer, zero-padded
    out_ref = refs[2 + N_LAYERS]

    h = x_ref[...]                      # (TM, 256) f32
    for layer in range(N_LAYERS):
        w = w_refs[layer][...]          # bf16, (in_pad, out_pad)
        out_w = w.shape[1]              # static, multiple of 128
        # bf16 x bf16 MXU matmul with f32 accumulation.
        acc = jnp.dot(h.astype(jnp.bfloat16), w,
                      preferred_element_type=jnp.float32)
        # Bias-add and ReLU stay in f32 (v5e VPU has no bf16).
        h = acc + b_ref[layer:layer + 1, :out_w]
        if layer < N_LAYERS - 1:
            h = jnp.maximum(h, 0.0)     # ReLU(inplace=True)
    out_ref[...] = h                    # lane-dense (TM, 128) store


def linear_encoder_forward(params, x, *, n_z):
    """Forward pass of LinearEncoder. x: (N, img_size**2) float32."""
    x = x.astype(jnp.float32)
    n = x.shape[0]
    ws = params["ws"]                   # 8 bf16 matrices, (in_pad, out_pad)
    b_slab = params["b"]                # (8, max_out) f32
    din_pad = ws[0].shape[0]
    out_cols = ws[-1].shape[1]

    # Pad input features if the first layer's fan_in was lane-padded
    # (zero rows in W1 make the extra columns inert).
    if x.shape[1] != din_pad:
        x = jnp.pad(x, ((0, 0), (0, din_pad - x.shape[1])))

    # Batch tiling: TM rows per grid step; weights pinned via constant index_map.
    if n <= TM_MAX:
        tm, n_pad = n, n
    else:
        tm = TM_MAX
        n_pad = pl.cdiv(n, tm) * tm
        if n_pad != n:
            x = jnp.pad(x, ((0, n_pad - n), (0, 0)))
    grid = (n_pad // tm,)

    x_spec = pl.BlockSpec((tm, din_pad), lambda i: (i, 0))
    w_specs = [pl.BlockSpec(w.shape, lambda i: (0, 0)) for w in ws]
    b_spec = pl.BlockSpec(b_slab.shape, lambda i: (0, 0))
    out_spec = pl.BlockSpec((tm, out_cols), lambda i: (i, 0))

    flops = 2 * n_pad * sum(int(w.shape[0]) * int(w.shape[1]) for w in ws)
    bytes_accessed = (sum(w.size * 2 for w in ws)      # bf16 weights
                      + b_slab.size * 4                # f32 bias slab
                      + n_pad * din_pad * 4            # x
                      + n_pad * out_cols * 4)          # out

    out = pl.pallas_call(
        _mlp_kernel,
        out_shape=jax.ShapeDtypeStruct((n_pad, out_cols), jnp.float32),
        grid=grid,
        in_specs=[x_spec, *w_specs, b_spec],
        out_specs=out_spec,
        compiler_params=pltpu.CompilerParams(
            dimension_semantics=("parallel",)),
        cost_estimate=pl.CostEstimate(
            flops=flops, transcendentals=0, bytes_accessed=bytes_accessed),
    )(x, *ws, b_slab)

    out = out[:n, :n_z]          # drop batch padding + lane padding
    return jnp.squeeze(out)      # matches x.squeeze() in forward()


# ----------------------------------------------------------------------------
# Deterministic parameter init (shapes from LinearEncoder.__init__)
# ----------------------------------------------------------------------------
def init_params(key, img_size=16, dim_h=32, n_z=8):
    dims = [img_size ** 2, dim_h * 16, dim_h * 8, dim_h * 8, dim_h * 8,
            dim_h * 4, dim_h * 2, dim_h, n_z]
    pad = lambda d: max(LANE, ((d + LANE - 1) // LANE) * LANE)
    pdims = [pad(d) for d in dims]
    max_out = max(pdims[1:])

    ks = jax.random.split(key, 2 * N_LAYERS)
    ws, b_rows = [], []
    for layer in range(N_LAYERS):
        fan_in, fan_out = dims[layer], dims[layer + 1]
        pin, pout = pdims[layer], pdims[layer + 1]
        bound = 1.0 / (fan_in ** 0.5)
        # PyTorch Linear weight is (out, in); stored pre-transposed (in, out)
        # so the kernel does h @ W directly.  Zero-pad rows/cols to 128-lane
        # multiples: padded activation lanes are exactly 0 (zero cols + zero
        # bias), padded weight rows meet only those zero lanes.
        w = jax.random.uniform(ks[2 * layer], (fan_in, fan_out),
                               jnp.float32, -bound, bound)
        b = jax.random.uniform(ks[2 * layer + 1], (fan_out,),
                               jnp.float32, -bound, bound)
        w = jnp.pad(w, ((0, pin - fan_in), (0, pout - fan_out)))
        b = jnp.pad(b, (0, max_out - fan_out))
        ws.append(w.astype(jnp.bfloat16))   # bf16 weights: half the DMA bytes
        b_rows.append(b)
    b_slab = jnp.stack(b_rows)              # (8, 512) f32, one DMA descriptor
    return {"ws": ws, "b": b_slab}


if __name__ == "__main__":
    key = jax.random.PRNGKey(0)
    kx, kp = jax.random.split(key)

    batch, img_size, dim_h, n_z = 2, 16, 32, 8
    x = jax.random.normal(kx, (batch, img_size ** 2), jnp.float32)
    params = init_params(kp, img_size=img_size, dim_h=dim_h, n_z=n_z)

    fwd = jax.jit(functools.partial(linear_encoder_forward, n_z=n_z))
    out = fwd(params, x)
    out = jax.block_until_ready(out)

    assert out.shape == (batch, n_z), out.shape
    assert out.dtype == jnp.float32
    assert bool(jnp.all(jnp.isfinite(out)))
    print("KERNEL_OK")
</pallas_src>

<mosaic_0001>
module attributes {stable_mosaic.version = 11 : i64} {
  func.func @_mlp_kernel(%arg0: i32, %arg1: memref<2x256xf32, #tpu.memory_space<vmem>>, %arg2: memref<256x512xbf16, #tpu.memory_space<vmem>>, %arg3: memref<512x256xbf16, #tpu.memory_space<vmem>>, %arg4: memref<256x256xbf16, #tpu.memory_space<vmem>>, %arg5: memref<256x256xbf16, #tpu.memory_space<vmem>>, %arg6: memref<256x128xbf16, #tpu.memory_space<vmem>>, %arg7: memref<128x128xbf16, #tpu.memory_space<vmem>>, %arg8: memref<128x128xbf16, #tpu.memory_space<vmem>>, %arg9: memref<128x128xbf16, #tpu.memory_space<vmem>>, %arg10: memref<8x512xf32, #tpu.memory_space<vmem>>, %arg11: memref<2x128xf32, #tpu.memory_space<vmem>>) attributes {dimension_semantics = [#tpu.dimension_semantics<parallel>], iteration_bounds = array<i64: 1>, scalar_prefetch = 0 : i64, scratch_operands = 0 : i64, tpu.core_type = #tpu.core_type<tc>, window_params = [{transform_indices = @transform_0, window_bounds = array<i64: 2, 256>}, {pipeline_mode = #tpu.pipeline_mode<synchronous>, transform_indices = @transform_1, window_bounds = array<i64: 256, 512>}, {pipeline_mode = #tpu.pipeline_mode<synchronous>, transform_indices = @transform_2, window_bounds = array<i64: 512, 256>}, {pipeline_mode = #tpu.pipeline_mode<synchronous>, transform_indices = @transform_3, window_bounds = array<i64: 256, 256>}, {pipeline_mode = #tpu.pipeline_mode<synchronous>, transform_indices = @transform_4, window_bounds = array<i64: 256, 256>}, {pipeline_mode = #tpu.pipeline_mode<synchronous>, transform_indices = @transform_5, window_bounds = array<i64: 256, 128>}, {pipeline_mode = #tpu.pipeline_mode<synchronous>, transform_indices = @transform_6, window_bounds = array<i64: 128, 128>}, {pipeline_mode = #tpu.pipeline_mode<synchronous>, transform_indices = @transform_7, window_bounds = array<i64: 128, 128>}, {pipeline_mode = #tpu.pipeline_mode<synchronous>, transform_indices = @transform_8, window_bounds = array<i64: 128, 128>}, {pipeline_mode = #tpu.pipeline_mode<synchronous>, transform_indices = @transform_9, window_bounds = array<i64: 8, 512>}, {transform_indices = @transform_10, window_bounds = array<i64: 2, 128>}]} {
    %c0 = arith.constant 0 : index
    %c0_0 = arith.constant 0 : index
    %0 = vector.load %arg1[%c0, %c0_0] : memref<2x256xf32, #tpu.memory_space<vmem>>, vector<2x256xf32>
    %c0_1 = arith.constant 0 : index
    %c0_2 = arith.constant 0 : index
    %1 = vector.load %arg2[%c0_1, %c0_2] : memref<256x512xbf16, #tpu.memory_space<vmem>>, vector<256x512xbf16>
    %2 = arith.truncf %0 : vector<2x256xf32> to vector<2x256xbf16>
    %cst = arith.constant dense<0.000000e+00> : vector<2x512xf32>
    %3 = tpu.matmul %2, %1, %cst {dimension_numbers = #tpu.dot_dimension_numbers<[1], [0], [0], [1], [0, 0, 1, 1], [], []>} : vector<2x256xbf16>, vector<256x512xbf16>, vector<2x512xf32> -> vector<2x512xf32>
    %c0_3 = arith.constant 0 : index
    %c0_4 = arith.constant 0 : index
    %4 = vector.load %arg10[%c0_3, %c0_4] : memref<8x512xf32, #tpu.memory_space<vmem>>, vector<1x512xf32>
    %5 = vector.broadcast %4 : vector<1x512xf32> to vector<2x512xf32>
    %6 = arith.addf %3, %5 : vector<2x512xf32>
    %cst_5 = arith.constant 0.000000e+00 : f32
    %7 = vector.broadcast %cst_5 : f32 to vector<2x512xf32>
    %8 = arith.maximumf %6, %7 : vector<2x512xf32>
    %c0_6 = arith.constant 0 : index
    %c0_7 = arith.constant 0 : index
    %9 = vector.load %arg3[%c0_6, %c0_7] : memref<512x256xbf16, #tpu.memory_space<vmem>>, vector<512x256xbf16>
    %10 = arith.truncf %8 : vector<2x512xf32> to vector<2x512xbf16>
    %cst_8 = arith.constant dense<0.000000e+00> : vector<2x256xf32>
    %11 = tpu.matmul %10, %9, %cst_8 {dimension_numbers = #tpu.dot_dimension_numbers<[1], [0], [0], [1], [0, 0, 1, 1], [], []>} : vector<2x512xbf16>, vector<512x256xbf16>, vector<2x256xf32> -> vector<2x256xf32>
    %c1 = arith.constant 1 : index
    %c0_9 = arith.constant 0 : index
    %12 = vector.load %arg10[%c1, %c0_9] : memref<8x512xf32, #tpu.memory_space<vmem>>, vector<1x256xf32>
    %13 = vector.broadcast %12 : vector<1x256xf32> to vector<2x256xf32>
    %14 = arith.addf %11, %13 : vector<2x256xf32>
    %cst_10 = arith.constant 0.000000e+00 : f32
    %15 = vector.broadcast %cst_10 : f32 to vector<2x256xf32>
    %16 = arith.maximumf %14, %15 : vector<2x256xf32>
    %c0_11 = arith.constant 0 : index
    %c0_12 = arith.constant 0 : index
    %17 = vector.load %arg4[%c0_11, %c0_12] : memref<256x256xbf16, #tpu.memory_space<vmem>>, vector<256x256xbf16>
    %18 = arith.truncf %16 : vector<2x256xf32> to vector<2x256xbf16>
    %cst_13 = arith.constant dense<0.000000e+00> : vector<2x256xf32>
    %19 = tpu.matmul %18, %17, %cst_13 {dimension_numbers = #tpu.dot_dimension_numbers<[1], [0], [0], [1], [0, 0, 1, 1], [], []>} : vector<2x256xbf16>, vector<256x256xbf16>, vector<2x256xf32> -> vector<2x256xf32>
    %c2 = arith.constant 2 : index
    %c0_14 = arith.constant 0 : index
    %20 = vector.load %arg10[%c2, %c0_14] : memref<8x512xf32, #tpu.memory_space<vmem>>, vector<1x256xf32>
    %21 = vector.broadcast %20 : vector<1x256xf32> to vector<2x256xf32>
    %22 = arith.addf %19, %21 : vector<2x256xf32>
    %cst_15 = arith.constant 0.000000e+00 : f32
    %23 = vector.broadcast %cst_15 : f32 to vector<2x256xf32>
    %24 = arith.maximumf %22, %23 : vector<2x256xf32>
    %c0_16 = arith.constant 0 : index
    %c0_17 = arith.constant 0 : index
    %25 = vector.load %arg5[%c0_16, %c0_17] : memref<256x256xbf16, #tpu.memory_space<vmem>>, vector<256x256xbf16>
    %26 = arith.truncf %24 : vector<2x256xf32> to vector<2x256xbf16>
    %cst_18 = arith.constant dense<0.000000e+00> : vector<2x256xf32>
    %27 = tpu.matmul %26, %25, %cst_18 {dimension_numbers = #tpu.dot_dimension_numbers<[1], [0], [0], [1], [0, 0, 1, 1], [], []>} : vector<2x256xbf16>, vector<256x256xbf16>, vector<2x256xf32> -> vector<2x256xf32>
    %c3 = arith.constant 3 : index
    %c0_19 = arith.constant 0 : index
    %28 = vector.load %arg10[%c3, %c0_19] : memref<8x512xf32, #tpu.memory_space<vmem>>, vector<1x256xf32>
    %29 = vector.broadcast %28 : vector<1x256xf32> to vector<2x256xf32>
    %30 = arith.addf %27, %29 : vector<2x256xf32>
    %cst_20 = arith.constant 0.000000e+00 : f32
    %31 = vector.broadcast %cst_20 : f32 to vector<2x256xf32>
    %32 = arith.maximumf %30, %31 : vector<2x256xf32>
    %c0_21 = arith.constant 0 : index
    %c0_22 = arith.constant 0 : index
    %33 = vector.load %arg6[%c0_21, %c0_22] : memref<256x128xbf16, #tpu.memory_space<vmem>>, vector<256x128xbf16>
    %34 = arith.truncf %32 : vector<2x256xf32> to vector<2x256xbf16>
    %cst_23 = arith.constant dense<0.000000e+00> : vector<2x128xf32>
    %35 = tpu.matmul %34, %33, %cst_23 {dimension_numbers = #tpu.dot_dimension_numbers<[1], [0], [0], [1], [0, 0, 1, 1], [], []>} : vector<2x256xbf16>, vector<256x128xbf16>, vector<2x128xf32> -> vector<2x128xf32>
    %c4 = arith.constant 4 : index
    %c0_24 = arith.constant 0 : index
    %36 = vector.load %arg10[%c4, %c0_24] : memref<8x512xf32, #tpu.memory_space<vmem>>, vector<1x128xf32>
    %37 = vector.broadcast %36 : vector<1x128xf32> to vector<2x128xf32>
    %38 = arith.addf %35, %37 : vector<2x128xf32>
    %cst_25 = arith.constant 0.000000e+00 : f32
    %39 = vector.broadcast %cst_25 : f32 to vector<2x128xf32>
    %40 = arith.maximumf %38, %39 : vector<2x128xf32>
    %c0_26 = arith.constant 0 : index
    %c0_27 = arith.constant 0 : index
    %41 = vector.load %arg7[%c0_26, %c0_27] : memref<128x128xbf16, #tpu.memory_space<vmem>>, vector<128x128xbf16>
    %42 = arith.truncf %40 : vector<2x128xf32> to vector<2x128xbf16>
    %cst_28 = arith.constant dense<0.000000e+00> : vector<2x128xf32>
    %43 = tpu.matmul %42, %41, %cst_28 {dimension_numbers = #tpu.dot_dimension_numbers<[1], [0], [0], [1], [0, 0, 1, 1], [], []>} : vector<2x128xbf16>, vector<128x128xbf16>, vector<2x128xf32> -> vector<2x128xf32>
    %c5 = arith.constant 5 : index
    %c0_29 = arith.constant 0 : index
    %44 = vector.load %arg10[%c5, %c0_29] : memref<8x512xf32, #tpu.memory_space<vmem>>, vector<1x128xf32>
    %45 = vector.broadcast %44 : vector<1x128xf32> to vector<2x128xf32>
    %46 = arith.addf %43, %45 : vector<2x128xf32>
    %cst_30 = arith.constant 0.000000e+00 : f32
    %47 = vector.broadcast %cst_30 : f32 to vector<2x128xf32>
    %48 = arith.maximumf %46, %47 : vector<2x128xf32>
    %c0_31 = arith.constant 0 : index
    %c0_32 = arith.constant 0 : index
    %49 = vector.load %arg8[%c0_31, %c0_32] : memref<128x128xbf16, #tpu.memory_space<vmem>>, vector<128x128xbf16>
    %50 = arith.truncf %48 : vector<2x128xf32> to vector<2x128xbf16>
    %cst_33 = arith.constant dense<0.000000e+00> : vector<2x128xf32>
    %51 = tpu.matmul %50, %49, %cst_33 {dimension_numbers = #tpu.dot_dimension_numbers<[1], [0], [0], [1], [0, 0, 1, 1], [], []>} : vector<2x128xbf16>, vector<128x128xbf16>, vector<2x128xf32> -> vector<2x128xf32>
    %c6 = arith.constant 6 : index
    %c0_34 = arith.constant 0 : index
    %52 = vector.load %arg10[%c6, %c0_34] : memref<8x512xf32, #tpu.memory_space<vmem>>, vector<1x128xf32>
    %53 = vector.broadcast %52 : vector<1x128xf32> to vector<2x128xf32>
    %54 = arith.addf %51, %53 : vector<2x128xf32>
    %cst_35 = arith.constant 0.000000e+00 : f32
    %55 = vector.broadcast %cst_35 : f32 to vector<2x128xf32>
    %56 = arith.maximumf %54, %55 : vector<2x128xf32>
    %c0_36 = arith.constant 0 : index
    %c0_37 = arith.constant 0 : index
    %57 = vector.load %arg9[%c0_36, %c0_37] : memref<128x128xbf16, #tpu.memory_space<vmem>>, vector<128x128xbf16>
    %58 = arith.truncf %56 : vector<2x128xf32> to vector<2x128xbf16>
    %cst_38 = arith.constant dense<0.000000e+00> : vector<2x128xf32>
    %59 = tpu.matmul %58, %57, %cst_38 {dimension_numbers = #tpu.dot_dimension_numbers<[1], [0], [0], [1], [0, 0, 1, 1], [], []>} : vector<2x128xbf16>, vector<128x128xbf16>, vector<2x128xf32> -> vector<2x128xf32>
    %c7 = arith.constant 7 : index
    %c0_39 = arith.constant 0 : index
    %60 = vector.load %arg10[%c7, %c0_39] : memref<8x512xf32, #tpu.memory_space<vmem>>, vector<1x128xf32>
    %61 = vector.broadcast %60 : vector<1x128xf32> to vector<2x128xf32>
    %62 = arith.addf %59, %61 : vector<2x128xf32>
    %c0_40 = arith.constant 0 : index
    %c0_41 = arith.constant 0 : index
    %63 = vector.load %arg11[%c0_40, %c0_41] : memref<2x128xf32, #tpu.memory_space<vmem>>, vector<2x128xf32>
    tpu.vector_store %arg11[%c0_40, %c0_41], %62 {strides = array<i32>} : memref<2x128xf32, #tpu.memory_space<vmem>>, vector<2x128xf32>,
    return
  }
  func.func @transform_0(%arg0: i32) -> (i32, i32) {
    %c0_i32 = arith.constant 0 : i32
    %c0_i32_0 = arith.constant 0 : i32
    return %arg0, %c0_i32 : i32, i32
  }
  func.func @transform_1(%arg0: i32) -> (i32, i32) {
    %c0_i32 = arith.constant 0 : i32
    %c0_i32_0 = arith.constant 0 : i32
    %c0_i32_1 = arith.constant 0 : i32
    return %c0_i32, %c0_i32_0 : i32, i32
  }
  func.func @transform_2(%arg0: i32) -> (i32, i32) {
    %c0_i32 = arith.constant 0 : i32
    %c0_i32_0 = arith.constant 0 : i32
    %c0_i32_1 = arith.constant 0 : i32
    return %c0_i32, %c0_i32_0 : i32, i32
  }
  func.func @transform_3(%arg0: i32) -> (i32, i32) {
    %c0_i32 = arith.constant 0 : i32
    %c0_i32_0 = arith.constant 0 : i32
    %c0_i32_1 = arith.constant 0 : i32
    return %c0_i32, %c0_i32_0 : i32, i32
  }
  func.func @transform_4(%arg0: i32) -> (i32, i32) {
    %c0_i32 = arith.constant 0 : i32
    %c0_i32_0 = arith.constant 0 : i32
    %c0_i32_1 = arith.constant 0 : i32
    return %c0_i32, %c0_i32_0 : i32, i32
  }
  func.func @transform_5(%arg0: i32) -> (i32, i32) {
    %c0_i32 = arith.constant 0 : i32
    %c0_i32_0 = arith.constant 0 : i32
    %c0_i32_1 = arith.constant 0 : i32
    return %c0_i32, %c0_i32_0 : i32, i32
  }
  func.func @transform_6(%arg0: i32) -> (i32, i32) {
    %c0_i32 = arith.constant 0 : i32
    %c0_i32_0 = arith.constant 0 : i32
    %c0_i32_1 = arith.constant 0 : i32
    return %c0_i32, %c0_i32_0 : i32, i32
  }
  func.func @transform_7(%arg0: i32) -> (i32, i32) {
    %c0_i32 = arith.constant 0 : i32
    %c0_i32_0 = arith.constant 0 : i32
    %c0_i32_1 = arith.constant 0 : i32
    return %c0_i32, %c0_i32_0 : i32, i32
  }
  func.func @transform_8(%arg0: i32) -> (i32, i32) {
    %c0_i32 = arith.constant 0 : i32
    %c0_i32_0 = arith.constant 0 : i32
    %c0_i32_1 = arith.constant 0 : i32
    return %c0_i32, %c0_i32_0 : i32, i32
  }
  func.func @transform_9(%arg0: i32) -> (i32, i32) {
    %c0_i32 = arith.constant 0 : i32
    %c0_i32_0 = arith.constant 0 : i32
    %c0_i32_1 = arith.constant 0 : i32
    return %c0_i32, %c0_i32_0 : i32, i32
  }
  func.func @transform_10(%arg0: i32) -> (i32, i32) {
    %c0_i32 = arith.constant 0 : i32
    %c0_i32_0 = arith.constant 0 : i32
    return %arg0, %c0_i32 : i32, i32
  }
}

</mosaic_0001>

<llo_original>
// kernel: linear_encoder_forward.1
$region0: #{linear_encoder_forward.1}
  #allocation0 [shape = 'u32[]', space=smem, size = 0x4, offset = 0x4, fixed_abs, tag = 'smem constant byte address 0x4 - core index']
  #allocation1 [shape = 'u32[72,128]{1,0:T(1,128)}', space=vmem, size = 0x9000, scoped, tag = 'internal scratch']
  %s0 = inlined_call_operand.vmem [shape: f32[2,256], index: 0, kind: input, shape index: {}]
  %s1 = inlined_call_operand.hbm [shape: bf16[256,512], index: 1, kind: input, shape index: {}]
  %s2 = inlined_call_operand.hbm [shape: bf16[512,256], index: 2, kind: input, shape index: {}]
  %s3 = inlined_call_operand.hbm [shape: bf16[256,256], index: 3, kind: input, shape index: {}]
  %s4 = inlined_call_operand.hbm [shape: bf16[256,256], index: 4, kind: input, shape index: {}]
  %s5 = inlined_call_operand.hbm [shape: bf16[256,128], index: 5, kind: input, shape index: {}]
  %s6 = inlined_call_operand.hbm [shape: bf16[128,128], index: 6, kind: input, shape index: {}]
  %s7 = inlined_call_operand.hbm [shape: bf16[128,128], index: 7, kind: input, shape index: {}]
  %s8 = inlined_call_operand.hbm [shape: bf16[128,128], index: 8, kind: input, shape index: {}]
  %s9 = inlined_call_operand.hbm [shape: f32[8,512], index: 9, kind: input, shape index: {}]
  %s10 = inlined_call_operand.hbm [shape: f32[2,128], index: 10, kind: output, shape index: {}]
  %s11 = sld [smem:[#allocation0]]
  $region86: #{linear_encoder_forward.1} parent=0
    _
  %s13 = ssub.s32 1, %s11
  %s14 = scalar_select 0, %s13, %s11
  $region1: #{linear_encoder_forward.1} parent=0
    #allocation2 [shape = 'u8[262144]{0}', space=vmem, size = 0x40000, scoped, tag = 'input window, operand 1, single buffered']
    #allocation3 [shape = 's32[1]{0}', space=sflag, size = 0x4, scoped, tag = 'scoped memory for linear_encoder_forward.1']
    #allocation4 [shape = 's32[1]{0}', space=sflag, size = 0x4, scoped, tag = 'scoped memory for linear_encoder_forward.1']
    #allocation5 [shape = 'u8[262144]{0}', space=vmem, size = 0x40000, scoped, tag = 'input window, operand 2, single buffered']
    #allocation6 [shape = 's32[1]{0}', space=sflag, size = 0x4, scoped, tag = 'scoped memory for linear_encoder_forward.1']
    #allocation7 [shape = 'u8[131072]{0}', space=vmem, size = 0x20000, scoped, tag = 'input window, operand 3, single buffered']
    #allocation8 [shape = 'u8[131072]{0}', space=vmem, size = 0x20000, scoped, tag = 'input window, operand 4, single buffered']
    #allocation9 [shape = 's32[1]{0}', space=sflag, size = 0x4, scoped, tag = 'scoped memory for linear_encoder_forward.1']
    #allocation10 [shape = 'u8[65536]{0}', space=vmem, size = 0x10000, scoped, tag = 'input window, operand 5, single buffered']
    #allocation11 [shape = 'u8[32768]{0}', space=vmem, size = 0x8000, scoped, tag = 'input window, operand 6, single buffered']
    #allocation12 [shape = 's32[1]{0}', space=sflag, size = 0x4, scoped, tag = 'scoped memory for linear_encoder_forward.1']
    #allocation13 [shape = 'u8[32768]{0}', space=vmem, size = 0x8000, scoped, tag = 'input window, operand 7, single buffered']
    #allocation14 [shape = 'u8[32768]{0}', space=vmem, size = 0x8000, scoped, tag = 'input window, operand 8, single buffered']
    #allocation15 [shape = 's32[1]{0}', space=sflag, size = 0x4, scoped, tag = 'scoped memory for linear_encoder_forward.1']
    #allocation16 [shape = 'u8[16384]{0}', space=vmem, size = 0x4000, scoped, tag = 'input window, operand 9, single buffered']
    #allocation17 [shape = 'u8[1024]{0}', space=vmem, size = 0x400, scoped, tag = 'output window, operand 0, single buffered']
    %15 = vsyncpa [#allocation3], 0
    %16 = vsyncpa [#allocation6], 0
    %17 = vsyncpa [#allocation9], 0
    %18 = vsyncpa [#allocation12], 0
    %19 = vsyncpa [#allocation15], 0
    %20 = vsyncpa [#allocation4], 0
    // Predicated region
    $region2: #{linear_encoder_forward.1} parent=1 // pred_check
      _
    $region3: #{linear_encoder_forward.1} parent=1 // pred_check_branch
      %22 = sbr.rel (0) target = $region5
    $region4: #{linear_encoder_forward.1} parent=1 // pred_region
      _
    $region5: #{linear_encoder_forward.1} parent=1 // pred_fallthru
      _
    // Predicated region
    $region6: #{linear_encoder_forward.1} parent=1 // pred_check
      _
    $region7: #{linear_encoder_forward.1} parent=1 // pred_check_branch
      %24 = sbr.rel (0) target = $region9
    $region8: #{linear_encoder_forward.1} parent=1 // pred_region
      %26 = vsyncadd [#allocation3], 0
      %s27 = sshll.u32 %s1, 4
      %s28 = int_to_ptr.hbm [resolvable:$true] %s27
      %s29 = sshll.u32 [#allocation2], 4
      %s30 = int_to_ptr.vmem [resolvable:$true] %s29
      %35 = dma.hbm_to_vmem [thread:$0]  %s28, 8192, %s30, [#allocation3], 256, 256, 16
    $region9: #{linear_encoder_forward.1} parent=1 // pred_fallthru
      _
    // Predicated region
    $region10: #{linear_encoder_forward.1} parent=1 // pred_check
      _
    $region11: #{linear_encoder_forward.1} parent=1 // pred_check_branch
      %37 = sbr.rel (0) target = $region13
    $region12: #{linear_encoder_forward.1} parent=1 // pred_region
      %39 = vsyncadd [#allocation6], 0
      %s40 = sshll.u32 %s2, 4
      %s41 = int_to_ptr.hbm [resolvable:$true] %s40
      %s42 = sshll.u32 [#allocation5], 4
      %s43 = int_to_ptr.vmem [resolvable:$true] %s42
      %48 = dma.hbm_to_vmem [thread:$0]  %s41, 8192, %s43, [#allocation6], 128, 128, 8
    $region13: #{linear_encoder_forward.1} parent=1 // pred_fallthru
      _
    // Predicated region
    $region14: #{linear_encoder_forward.1} parent=1 // pred_check
      _
    $region15: #{linear_encoder_forward.1} parent=1 // pred_check_branch
      %50 = sbr.rel (0) target = $region17
    $region16: #{linear_encoder_forward.1} parent=1 // pred_region
      %52 = vsyncadd [#allocation6], 0
      %s53 = sshll.u32 %s3, 4
      %s54 = int_to_ptr.hbm [resolvable:$true] %s53
      %s55 = sshll.u32 [#allocation7], 4
      %s56 = int_to_ptr.vmem [resolvable:$true] %s55
      %61 = dma.hbm_to_vmem [thread:$0]  %s54, 4096, %s56, [#allocation6], 128, 128, 8
    $region17: #{linear_encoder_forward.1} parent=1 // pred_fallthru
      _
    // Predicated region
    $region18: #{linear_encoder_forward.1} parent=1 // pred_check
      _
    $region19: #{linear_encoder_forward.1} parent=1 // pred_check_branch
      %63 = sbr.rel (0) target = $region21
    $region20: #{linear_encoder_forward.1} parent=1 // pred_region
      %65 = vsyncadd [#allocation9], 0
      %s66 = sshll.u32 %s4, 4
      %s67 = int_to_ptr.hbm [resolvable:$true] %s66
      %s68 = sshll.u32 [#allocation8], 4
      %s69 = int_to_ptr.vmem [resolvable:$true] %s68
      %74 = dma.hbm_to_vmem [thread:$0]  %s67, 4096, %s69, [#allocation9], 128, 128, 8
    $region21: #{linear_encoder_forward.1} parent=1 // pred_fallthru
      _
    // Predicated region
    $region22: #{linear_encoder_forward.1} parent=1 // pred_check
      _
    $region23: #{linear_encoder_forward.1} parent=1 // pred_check_branch
      %76 = sbr.rel (0) target = $region25
    $region24: #{linear_encoder_forward.1} parent=1 // pred_region
      %78 = vsyncadd [#allocation9], 0
      %s79 = sshll.u32 %s5, 4
      %s80 = int_to_ptr.hbm [resolvable:$true] %s79
      %s81 = sshll.u32 [#allocation10], 4
      %s82 = int_to_ptr.vmem [resolvable:$true] %s81
      %87 = dma.hbm_to_vmem [thread:$0]  %s80, 2048, %s82, [#allocation9], 64, 64, 4
    $region25: #{linear_encoder_forward.1} parent=1 // pred_fallthru
      _
    // Predicated region
    $region26: #{linear_encoder_forward.1} parent=1 // pred_check
      _
    $region27: #{linear_encoder_forward.1} parent=1 // pred_check_branch
      %89 = sbr.rel (0) target = $region29
    $region28: #{linear_encoder_forward.1} parent=1 // pred_region
      %91 = vsyncadd [#allocation12], 0
      %s92 = sshll.u32 %s6, 4
      %s93 = int_to_ptr.hbm [resolvable:$true] %s92
      %s94 = sshll.u32 [#allocation11], 4
      %s95 = int_to_ptr.vmem [resolvable:$true] %s94
      %100 = dma.hbm_to_vmem [thread:$0]  %s93, 1024, %s95, [#allocation12], 64, 64, 4
    $region29: #{linear_encoder_forward.1} parent=1 // pred_fallthru
      _
    // Predicated region
    $region30: #{linear_encoder_forward.1} parent=1 // pred_check
      _
    $region31: #{linear_encoder_forward.1} parent=1 // pred_check_branch
      %102 = sbr.rel (0) target = $region33
    $region32: #{linear_encoder_forward.1} parent=1 // pred_region
      %104 = vsyncadd [#allocation12], 0
      %s105 = sshll.u32 %s7, 4
      %s106 = int_to_ptr.hbm [resolvable:$true] %s105
      %s107 = sshll.u32 [#allocation13], 4
      %s108 = int_to_ptr.vmem [resolvable:$true] %s107
      %113 = dma.hbm_to_vmem [thread:$0]  %s106, 1024, %s108, [#allocation12], 64, 64, 4
    $region33: #{linear_encoder_forward.1} parent=1 // pred_fallthru
      _
    // Predicated region
    $region34: #{linear_encoder_forward.1} parent=1 // pred_check
      _
    $region35: #{linear_encoder_forward.1} parent=1 // pred_check_branch
      %115 = sbr.rel (0) target = $region37
    $region36: #{linear_encoder_forward.1} parent=1 // pred_region
      %117 = vsyncadd [#allocation15], 0
      %s118 = sshll.u32 %s8, 4
      %s119 = int_to_ptr.hbm [resolvable:$true] %s118
      %s120 = sshll.u32 [#allocation14], 4
      %s121 = int_to_ptr.vmem [resolvable:$true] %s120
      %126 = dma.hbm_to_vmem [thread:$0]  %s119, 1024, %s121, [#allocation15], 64, 64, 4
    $region37: #{linear_encoder_forward.1} parent=1 // pred_fallthru
      _
    // Predicated region
    $region38: #{linear_encoder_forward.1} parent=1 // pred_check
      _
    $region39: #{linear_encoder_forward.1} parent=1 // pred_check_branch
      %128 = sbr.rel (0) target = $region41
    $region40: #{linear_encoder_forward.1} parent=1 // pred_region
      %130 = vsyncadd [#allocation15], 0
      %s132 = sshll.u32 %s9, 4
      %s133 = int_to_ptr.hbm [resolvable:$true] %s132
      %s134 = sshll.u32 [#allocation16], 4
      %s135 = int_to_ptr.vmem [resolvable:$true] %s134
      %137 = dma.hbm_to_vmem [thread:$0]  %s133, 512, %s135, [#allocation15]
    $region41: #{linear_encoder_forward.1} parent=1 // pred_fallthru
      _
    // Predicated region
    $region42: #{linear_encoder_forward.1} parent=1 // pred_check
      _
    $region43: #{linear_encoder_forward.1} parent=1 // pred_check_branch
      %139 = sbr.rel (0) target = $region45
    $region44: #{linear_encoder_forward.1} parent=1 // pred_region
      %141 = dma.done [#allocation3], 8192
    $region45: #{linear_encoder_forward.1} parent=1 // pred_fallthru
      _
    // Predicated region
    $region46: #{linear_encoder_forward.1} parent=1 // pred_check
      _
    $region47: #{linear_encoder_forward.1} parent=1 // pred_check_branch
      %143 = sbr.rel (0) target = $region49
    $region48: #{linear_encoder_forward.1} parent=1 // pred_region
      %145 = dma.done [#allocation6], 8192
    $region49: #{linear_encoder_forward.1} parent=1 // pred_fallthru
      _
    // Predicated region
    $region50: #{linear_encoder_forward.1} parent=1 // pred_check
      _
    $region51: #{linear_encoder_forward.1} parent=1 // pred_check_branch
      %147 = sbr.rel (0) target = $region53
    $region52: #{linear_encoder_forward.1} parent=1 // pred_region
      %149 = dma.done [#allocation6], 4096
    $region53: #{linear_encoder_forward.1} parent=1 // pred_fallthru
      _
    // Predicated region
    $region54: #{linear_encoder_forward.1} parent=1 // pred_check
      _
    $region55: #{linear_encoder_forward.1} parent=1 // pred_check_branch
      %151 = sbr.rel (0) target = $region57
    $region56: #{linear_encoder_forward.1} parent=1 // pred_region
      %153 = dma.done [#allocation9], 4096
    $region57: #{linear_encoder_forward.1} parent=1 // pred_fallthru
      _
    // Predicated region
    $region58: #{linear_encoder_forward.1} parent=1 // pred_check
      _
    $region59: #{linear_encoder_forward.1} parent=1 // pred_check_branch
      %155 = sbr.rel (0) target = $region61
    $region60: #{linear_encoder_forward.1} parent=1 // pred_region
      %157 = dma.done [#allocation9], 2048
    $region61: #{linear_encoder_forward.1} parent=1 // pred_fallthru
      _
    // Predicated region
    $region62: #{linear_encoder_forward.1} parent=1 // pred_check
      _
    $region63: #{linear_encoder_forward.1} parent=1 // pred_check_branch
      %159 = sbr.rel (0) target = $region65
    $region64: #{linear_encoder_forward.1} parent=1 // pred_region
      %161 = dma.done [#allocation12], 1024
    $region65: #{linear_encoder_forward.1} parent=1 // pred_fallthru
      _
    // Predicated region
    $region66: #{linear_encoder_forward.1} parent=1 // pred_check
      _
    $region67: #{linear_encoder_forward.1} parent=1 // pred_check_branch
      %163 = sbr.rel (0) target = $region69
    $region68: #{linear_encoder_forward.1} parent=1 // pred_region
      %165 = dma.done [#allocation12], 1024
    $region69: #{linear_encoder_forward.1} parent=1 // pred_fallthru
      _
    // Predicated region
    $region70: #{linear_encoder_forward.1} parent=1 // pred_check
      _
    $region71: #{linear_encoder_forward.1} parent=1 // pred_check_branch
      %167 = sbr.rel (0) target = $region73
    $region72: #{linear_encoder_forward.1} parent=1 // pred_region
      %169 = dma.done [#allocation15], 1024
    $region73: #{linear_encoder_forward.1} parent=1 // pred_fallthru
      _
    // Predicated region
    $region74: #{linear_encoder_forward.1} parent=1 // pred_check
      _
    $region75: #{linear_encoder_forward.1} parent=1 // pred_check_branch
      %171 = sbr.rel (0) target = $region77
    $region76: #{linear_encoder_forward.1} parent=1 // pred_region
      %173 = dma.done [#allocation15], 512
    $region77: #{linear_encoder_forward.1} parent=1 // pred_fallthru
      _
    %v174 = vld [vmem:[%s0] sm:$0xf]
    %v175 = vld [vmem:[#allocation2] sm:$0xff]
    %v176 = vld [vmem:[#allocation2 + $0x8] sm:$0xff]
    %v177 = vld [vmem:[#allocation2 + $0x10] sm:$0xff]
    %v178 = vld [vmem:[#allocation2 + $0x18] sm:$0xff]
    %v179 = vld [vmem:[#allocation2 + $0x20] sm:$0xff]
    %v180 = vld [vmem:[#allocation2 + $0x28] sm:$0xff]
    %v181 = vld [vmem:[#allocation2 + $0x30] sm:$0xff]
    %v182 = vld [vmem:[#allocation2 + $0x38] sm:$0xff]
    %v183 = vld [vmem:[#allocation2 + $0x40] sm:$0xff]
    %v184 = vld [vmem:[#allocation2 + $0x48] sm:$0xff]
    %v185 = vld [vmem:[#allocation2 + $0x50] sm:$0xff]
    %v186 = vld [vmem:[#allocation2 + $0x58] sm:$0xff]
    %v187 = vld [vmem:[#allocation2 + $0x60] sm:$0xff]
    %v188 = vld [vmem:[#allocation2 + $0x68] sm:$0xff]
    %v189 = vld [vmem:[#allocation2 + $0x70] sm:$0xff]
    %v190 = vld [vmem:[#allocation2 + $0x78] sm:$0xff]
    %v191 = vld [vmem:[#allocation2 + $0x80] sm:$0xff]
    %v192 = vld [vmem:[#allocation2 + $0x88] sm:$0xff]
    %v193 = vld [vmem:[#allocation2 + $0x90] sm:$0xff]
    %v194 = vld [vmem:[#allocation2 + $0x98] sm:$0xff]
    %v195 = vld [vmem:[#allocation2 + $0xa0] sm:$0xff]
    %v196 = vld [vmem:[#allocation2 + $0xa8] sm:$0xff]
    %v197 = vld [vmem:[#allocation2 + $0xb0] sm:$0xff]
    %v198 = vld [vmem:[#allocation2 + $0xb8] sm:$0xff]
    %v199 = vld [vmem:[#allocation2 + $0xc0] sm:$0xff]
    %v200 = vld [vmem:[#allocation2 + $0xc8] sm:$0xff]
    %v201 = vld [vmem:[#allocation2 + $0xd0] sm:$0xff]
    %v202 = vld [vmem:[#allocation2 + $0xd8] sm:$0xff]
    %v203 = vld [vmem:[#allocation2 + $0xe0] sm:$0xff]
    %v204 = vld [vmem:[#allocation2 + $0xe8] sm:$0xff]
    %v205 = vld [vmem:[#allocation2 + $0xf0] sm:$0xff]
    %v206 = vld [vmem:[#allocation2 + $0xf8] sm:$0xff]
    %v207 = vld [vmem:[#allocation2 + $0x100] sm:$0xff]
    %v208 = vld [vmem:[#allocation2 + $0x108] sm:$0xff]
    %v209 = vld [vmem:[#allocation2 + $0x110] sm:$0xff]
    %v210 = vld [vmem:[#allocation2 + $0x118] sm:$0xff]
    %v211 = vld [vmem:[#allocation2 + $0x120] sm:$0xff]
    %v212 = vld [vmem:[#allocation2 + $0x128] sm:$0xff]
    %v213 = vld [vmem:[#allocation2 + $0x130] sm:$0xff]
    %v214 = vld [vmem:[#allocation2 + $0x138] sm:$0xff]
    %v215 = vld [vmem:[#allocation2 + $0x140] sm:$0xff]
    %v216 = vld [vmem:[#allocation2 + $0x148] sm:$0xff]
    %v217 = vld [vmem:[#allocation2 + $0x150] sm:$0xff]
    %v218 = vld [vmem:[#allocation2 + $0x158] sm:$0xff]
    %v219 = vld [vmem:[#allocation2 + $0x160] sm:$0xff]
    %v220 = vld [vmem:[#allocation2 + $0x168] sm:$0xff]
    %v221 = vld [vmem:[#allocation2 + $0x170] sm:$0xff]
    %v222 = vld [vmem:[#allocation2 + $0x178] sm:$0xff]
    %v223 = vld [vmem:[#allocation2 + $0x180] sm:$0xff]
    %v224 = vld [vmem:[#allocation2 + $0x188] sm:$0xff]
    %v225 = vld [vmem:[#allocation2 + $0x190] sm:$0xff]
    %v226 = vld [vmem:[#allocation2 + $0x198] sm:$0xff]
    %v227 = vld [vmem:[#allocation2 + $0x1a0] sm:$0xff]
    %v228 = vld [vmem:[#allocation2 + $0x1a8] sm:$0xff]
    %v229 = vld [vmem:[#allocation2 + $0x1b0] sm:$0xff]
    %v230 = vld [vmem:[#allocation2 + $0x1b8] sm:$0xff]
    %v231 = vld [vmem:[#allocation2 + $0x1c0] sm:$0xff]
    %v232 = vld [vmem:[#allocation2 + $0x1c8] sm:$0xff]
    %v233 = vld [vmem:[#allocation2 + $0x1d0] sm:$0xff]
    %v234 = vld [vmem:[#allocation2 + $0x1d8] sm:$0xff]
    %v235 = vld [vmem:[#allocation2 + $0x1e0] sm:$0xff]
    %v236 = vld [vmem:[#allocation2 + $0x1e8] sm:$0xff]
    %v237 = vld [vmem:[#allocation2 + $0x1f0] sm:$0xff]
    %v238 = vld [vmem:[#allocation2 + $0x1f8] sm:$0xff]
    %240 = vst [vmem:[#allocation1] ss:$4 sm:$0xff] %v174
    %v241 = vld.sshfl [vmem:[#allocation1] sm:$0xff pattern:$0x73625140]
    %v242 = vld.sshfl [vmem:[#allocation1 + $0x8] sm:$0xff pattern:$0x73625140]
    %v245 = vpack.c.bf16 %v241, %v241
    %v246 = vpack.c.bf16 %v242, %v242
    %v247 = vld [vmem:[#allocation16] ss:$8 sm:$0xf]
    %v249 = vperm.slane %v247, 0
    %v250 = vperm.slane %v247, 1
    %v251 = vperm.slane %v247, 2
    %v252 = vperm.slane %v247, 3
    %v321 = vunpack.c.l.b16 %v175
    %v322 = vunpack.c.h.b16 %v175
    %v323 = vunpack.c.l.b16 %v176
    %v324 = vunpack.c.h.b16 %v176
    %v325 = vunpack.c.l.b16 %v177
    %v326 = vunpack.c.h.b16 %v177
    %v327 = vunpack.c.l.b16 %v178
    %v328 = vunpack.c.h.b16 %v178
    %v329 = vunpack.c.l.b16 %v179
    %v330 = vunpack.c.h.b16 %v179
    %v331 = vunpack.c.l.b16 %v180
    %v332 = vunpack.c.h.b16 %v180
    %v333 = vunpack.c.l.b16 %v181
    %v334 = vunpack.c.h.b16 %v181
    %v335 = vunpack.c.l.b16 %v182
    %v336 = vunpack.c.h.b16 %v182
    %v337 = vunpack.c.l.b16 %v183
    %v338 = vunpack.c.h.b16 %v183
    %v339 = vunpack.c.l.b16 %v184
    %v340 = vunpack.c.h.b16 %v184
    %v341 = vunpack.c.l.b16 %v185
    %v342 = vunpack.c.h.b16 %v185
    %v343 = vunpack.c.l.b16 %v186
    %v344 = vunpack.c.h.b16 %v186
    %v345 = vunpack.c.l.b16 %v187
    %v346 = vunpack.c.h.b16 %v187
    %v347 = vunpack.c.l.b16 %v188
    %v348 = vunpack.c.h.b16 %v188
    %v349 = vunpack.c.l.b16 %v189
    %v350 = vunpack.c.h.b16 %v189
    %v351 = vunpack.c.l.b16 %v190
    %v352 = vunpack.c.h.b16 %v190
    %v353 = vunpack.c.l.b16 %v191
    %v354 = vunpack.c.h.b16 %v191
    %v355 = vunpack.c.l.b16 %v192
    %v356 = vunpack.c.h.b16 %v192
    %v357 = vunpack.c.l.b16 %v193
    %v358 = vunpack.c.h.b16 %v193
    %v359 = vunpack.c.l.b16 %v194
    %v360 = vunpack.c.h.b16 %v194
    %v361 = vunpack.c.l.b16 %v195
    %v362 = vunpack.c.h.b16 %v195
    %v363 = vunpack.c.l.b16 %v196
    %v364 = vunpack.c.h.b16 %v196
    %v365 = vunpack.c.l.b16 %v197
    %v366 = vunpack.c.h.b16 %v197
    %v367 = vunpack.c.l.b16 %v198
    %v368 = vunpack.c.h.b16 %v198
    %v369 = vunpack.c.l.b16 %v199
    %v370 = vunpack.c.h.b16 %v199
    %v371 = vunpack.c.l.b16 %v200
    %v372 = vunpack.c.h.b16 %v200
    %v373 = vunpack.c.l.b16 %v201
    %v374 = vunpack.c.h.b16 %v201
    %v375 = vunpack.c.l.b16 %v202
    %v376 = vunpack.c.h.b16 %v202
    %v377 = vunpack.c.l.b16 %v203
    %v378 = vunpack.c.h.b16 %v203
    %v379 = vunpack.c.l.b16 %v204
    %v380 = vunpack.c.h.b16 %v204
    %v381 = vunpack.c.l.b16 %v205
    %v382 = vunpack.c.h.b16 %v205
    %v383 = vunpack.c.l.b16 %v206
    %v384 = vunpack.c.h.b16 %v206
    %v385 = vunpack.c.l.b16 %v207
    %v386 = vunpack.c.h.b16 %v207
    %v387 = vunpack.c.l.b16 %v208
    %v388 = vunpack.c.h.b16 %v208
    %v389 = vunpack.c.l.b16 %v209
    %v390 = vunpack.c.h.b16 %v209
    %v391 = vunpack.c.l.b16 %v210
    %v392 = vunpack.c.h.b16 %v210
    %v393 = vunpack.c.l.b16 %v211
    %v394 = vunpack.c.h.b16 %v211
    %v395 = vunpack.c.l.b16 %v212
    %v396 = vunpack.c.h.b16 %v212
    %v397 = vunpack.c.l.b16 %v213
    %v398 = vunpack.c.h.b16 %v213
    %v399 = vunpack.c.l.b16 %v214
    %v400 = vunpack.c.h.b16 %v214
    %v401 = vunpack.c.l.b16 %v215
    %v402 = vunpack.c.h.b16 %v215
    %v403 = vunpack.c.l.b16 %v216
    %v404 = vunpack.c.h.b16 %v216
    %v405 = vunpack.c.l.b16 %v217
    %v406 = vunpack.c.h.b16 %v217
    %v407 = vunpack.c.l.b16 %v218
    %v408 = vunpack.c.h.b16 %v218
    %v409 = vunpack.c.l.b16 %v219
    %v410 = vunpack.c.h.b16 %v219
    %v411 = vunpack.c.l.b16 %v220
    %v412 = vunpack.c.h.b16 %v220
    %v413 = vunpack.c.l.b16 %v221
    %v414 = vunpack.c.h.b16 %v221
    %v415 = vunpack.c.l.b16 %v222
    %v416 = vunpack.c.h.b16 %v222
    %v417 = vunpack.c.l.b16 %v223
    %v418 = vunpack.c.h.b16 %v223
    %v419 = vunpack.c.l.b16 %v224
    %v420 = vunpack.c.h.b16 %v224
    %v421 = vunpack.c.l.b16 %v225
    %v422 = vunpack.c.h.b16 %v225
    %v423 = vunpack.c.l.b16 %v226
    %v424 = vunpack.c.h.b16 %v226
    %v425 = vunpack.c.l.b16 %v227
    %v426 = vunpack.c.h.b16 %v227
    %v427 = vunpack.c.l.b16 %v228
    %v428 = vunpack.c.h.b16 %v228
    %v429 = vunpack.c.l.b16 %v229
    %v430 = vunpack.c.h.b16 %v229
    %v431 = vunpack.c.l.b16 %v230
    %v432 = vunpack.c.h.b16 %v230
    %v433 = vunpack.c.l.b16 %v231
    %v434 = vunpack.c.h.b16 %v231
    %v435 = vunpack.c.l.b16 %v232
    %v436 = vunpack.c.h.b16 %v232
    %v437 = vunpack.c.l.b16 %v233
    %v438 = vunpack.c.h.b16 %v233
    %v439 = vunpack.c.l.b16 %v234
    %v440 = vunpack.c.h.b16 %v234
    %v441 = vunpack.c.l.b16 %v235
    %v442 = vunpack.c.h.b16 %v235
    %v443 = vunpack.c.l.b16 %v236
    %v444 = vunpack.c.h.b16 %v236
    %v445 = vunpack.c.l.b16 %v237
    %v446 = vunpack.c.h.b16 %v237
    %v447 = vunpack.c.l.b16 %v238
    %v448 = vunpack.c.h.b16 %v238
    %v449 = vpack.c.b16 %v325, %v321
    %v450 = vpack.c.b16 %v326, %v322
    %v451 = vpack.c.b16 %v327, %v323
    %v452 = vpack.c.b16 %v328, %v324
    %v453 = vpack.c.b16 %v333, %v329
    %v454 = vpack.c.b16 %v334, %v330
    %v455 = vpack.c.b16 %v335, %v331
    %v456 = vpack.c.b16 %v336, %v332
    %v457 = vpack.c.b16 %v341, %v337
    %v458 = vpack.c.b16 %v342, %v338
    %v459 = vpack.c.b16 %v343, %v339
    %v460 = vpack.c.b16 %v344, %v340
    %v461 = vpack.c.b16 %v349, %v345
    %v462 = vpack.c.b16 %v350, %v346
    %v463 = vpack.c.b16 %v351, %v347
    %v464 = vpack.c.b16 %v352, %v348
    %v465 = vpack.c.b16 %v357, %v353
    %v466 = vpack.c.b16 %v358, %v354
    %v467 = vpack.c.b16 %v359, %v355
    %v468 = vpack.c.b16 %v360, %v356
    %v469 = vpack.c.b16 %v365, %v361
    %v470 = vpack.c.b16 %v366, %v362
    %v471 = vpack.c.b16 %v367, %v363
    %v472 = vpack.c.b16 %v368, %v364
    %v473 = vpack.c.b16 %v373, %v369
    %v474 = vpack.c.b16 %v374, %v370
    %v475 = vpack.c.b16 %v375, %v371
    %v476 = vpack.c.b16 %v376, %v372
    %v477 = vpack.c.b16 %v381, %v377
    %v478 = vpack.c.b16 %v382, %v378
    %v479 = vpack.c.b16 %v383, %v379
    %v480 = vpack.c.b16 %v384, %v380
    %v481 = vpack.c.b16 %v389, %v385
    %v482 = vpack.c.b16 %v390, %v386
    %v483 = vpack.c.b16 %v391, %v387
    %v484 = vpack.c.b16 %v392, %v388
    %v485 = vpack.c.b16 %v397, %v393
    %v486 = vpack.c.b16 %v398, %v394
    %v487 = vpack.c.b16 %v399, %v395
    %v488 = vpack.c.b16 %v400, %v396
    %v489 = vpack.c.b16 %v405, %v401
    %v490 = vpack.c.b16 %v406, %v402
    %v491 = vpack.c.b16 %v407, %v403
    %v492 = vpack.c.b16 %v408, %v404
    %v493 = vpack.c.b16 %v413, %v409
    %v494 = vpack.c.b16 %v414, %v410
    %v495 = vpack.c.b16 %v415, %v411
    %v496 = vpack.c.b16 %v416, %v412
    %v497 = vpack.c.b16 %v421, %v417
    %v498 = vpack.c.b16 %v422, %v418
    %v499 = vpack.c.b16 %v423, %v419
    %v500 = vpack.c.b16 %v424, %v420
    %v501 = vpack.c.b16 %v429, %v425
    %v502 = vpack.c.b16 %v430, %v426
    %v503 = vpack.c.b16 %v431, %v427
    %v504 = vpack.c.b16 %v432, %v428
    %v505 = vpack.c.b16 %v437, %v433
    %v506 = vpack.c.b16 %v438, %v434
    %v507 = vpack.c.b16 %v439, %v435
    %v508 = vpack.c.b16 %v440, %v436
    %v509 = vpack.c.b16 %v445, %v441
    %v510 = vpack.c.b16 %v446, %v442
    %v511 = vpack.c.b16 %v447, %v443
    %v512 = vpack.c.b16 %v448, %v444
    %577 = vmatpush.bf16.msra.mxu0 %v477
    %578 = vmatpush.bf16.msra.mxu0 %v473
    %579 = vmatpush.bf16.msra.mxu0 %v469
    %580 = vmatpush.bf16.msra.mxu0 %v465
    %581 = vmatpush.bf16.msra.mxu0 %v461
    %582 = vmatpush.bf16.msra.mxu0 %v457
    %583 = vmatpush.bf16.msra.mxu0 %v453
    %584 = vmatpush.bf16.msra.mxu0 %v449
    %585 = vmatmul.bf16.gmra.mxu0 %v245
    %v586 = vpop.f32.mrf.mxu0
    %v587 = vadd.f32 %v249, %v586
    %v588 = vpop.f32.mrf.mxu0
    %589 = vdwg.mxu0
    %590 = vmatpush.bf16.msra.mxu0 %v509
    %591 = vmatpush.bf16.msra.mxu0 %v505
    %592 = vmatpush.bf16.msra.mxu0 %v501
    %593 = vmatpush.bf16.msra.mxu0 %v497
    %594 = vmatpush.bf16.msra.mxu0 %v493
    %595 = vmatpush.bf16.msra.mxu0 %v489
    %596 = vmatpush.bf16.msra.mxu0 %v485
    %597 = vmatpush.bf16.msra.mxu0 %v481
    %598 = vmatmul.bf16.gmra.mxu0 %v246
    %v599 = vpop.f32.mrf.mxu0
    %v600 = vadd.f32 %v587, %v599
    %v601 = vpop.f32.mrf.mxu0
    %602 = vdwg.mxu0
    %603 = vmatpush.bf16.msra.mxu0 %v478
    %604 = vmatpush.bf16.msra.mxu0 %v474
    %605 = vmatpush.bf16.msra.mxu0 %v470
    %606 = vmatpush.bf16.msra.mxu0 %v466
    %607 = vmatpush.bf16.msra.mxu0 %v462
    %608 = vmatpush.bf16.msra.mxu0 %v458
    %609 = vmatpush.bf16.msra.mxu0 %v454
    %610 = vmatpush.bf16.msra.mxu0 %v450
    %611 = vmatmul.bf16.gmra.mxu0 %v245
    %v612 = vpop.f32.mrf.mxu0
    %v613 = vadd.f32 %v250, %v612
    %v614 = vpop.f32.mrf.mxu0
    %615 = vdwg.mxu0
    %616 = vmatpush.bf16.msra.mxu0 %v510
    %617 = vmatpush.bf16.msra.mxu0 %v506
    %618 = vmatpush.bf16.msra.mxu0 %v502
    %619 = vmatpush.bf16.msra.mxu0 %v498
    %620 = vmatpush.bf16.msra.mxu0 %v494
    %621 = vmatpush.bf16.msra.mxu0 %v490
    %622 = vmatpush.bf16.msra.mxu0 %v486
    %623 = vmatpush.bf16.msra.mxu0 %v482
    %624 = vmatmul.bf16.gmra.mxu0 %v246
    %v625 = vpop.f32.mrf.mxu0
    %v626 = vadd.f32 %v613, %v625
    %v627 = vpop.f32.mrf.mxu0
    %628 = vdwg.mxu0
    %629 = vmatpush.bf16.msra.mxu0 %v479
    %630 = vmatpush.bf16.msra.mxu0 %v475
    %631 = vmatpush.bf16.msra.mxu0 %v471
    %632 = vmatpush.bf16.msra.mxu0 %v467
    %633 = vmatpush.bf16.msra.mxu0 %v463
    %634 = vmatpush.bf16.msra.mxu0 %v459
    %635 = vmatpush.bf16.msra.mxu0 %v455
    %636 = vmatpush.bf16.msra.mxu0 %v451
    %637 = vmatmul.bf16.gmra.mxu0 %v245
    %v638 = vpop.f32.mrf.mxu0
    %v639 = vadd.f32 %v251, %v638
    %v640 = vpop.f32.mrf.mxu0
    %641 = vdwg.mxu0
    %642 = vmatpush.bf16.msra.mxu0 %v511
    %643 = vmatpush.bf16.msra.mxu0 %v507
    %644 = vmatpush.bf16.msra.mxu0 %v503
    %645 = vmatpush.bf16.msra.mxu0 %v499
    %646 = vmatpush.bf16.msra.mxu0 %v495
    %647 = vmatpush.bf16.msra.mxu0 %v491
    %648 = vmatpush.bf16.msra.mxu0 %v487
    %649 = vmatpush.bf16.msra.mxu0 %v483
    %650 = vmatmul.bf16.gmra.mxu0 %v246
    %v651 = vpop.f32.mrf.mxu0
    %v652 = vadd.f32 %v639, %v651
    %v653 = vpop.f32.mrf.mxu0
    %654 = vdwg.mxu0
    %655 = vmatpush.bf16.msra.mxu0 %v480
    %656 = vmatpush.bf16.msra.mxu0 %v476
    %657 = vmatpush.bf16.msra.mxu0 %v472
    %658 = vmatpush.bf16.msra.mxu0 %v468
    %659 = vmatpush.bf16.msra.mxu0 %v464
    %660 = vmatpush.bf16.msra.mxu0 %v460
    %661 = vmatpush.bf16.msra.mxu0 %v456
    %662 = vmatpush.bf16.msra.mxu0 %v452
    %663 = vmatmul.bf16.gmra.mxu0 %v245
    %v664 = vpop.f32.mrf.mxu0
    %v665 = vadd.f32 %v252, %v664
    %v666 = vpop.f32.mrf.mxu0
    %667 = vdwg.mxu0
    %668 = vmatpush.bf16.msra.mxu0 %v512
    %669 = vmatpush.bf16.msra.mxu0 %v508
    %670 = vmatpush.bf16.msra.mxu0 %v504
    %671 = vmatpush.bf16.msra.mxu0 %v500
    %672 = vmatpush.bf16.msra.mxu0 %v496
    %673 = vmatpush.bf16.msra.mxu0 %v492
    %674 = vmatpush.bf16.msra.mxu0 %v488
    %675 = vmatpush.bf16.msra.mxu0 %v484
    %676 = vmatmul.bf16.gmra.mxu0 %v246
    %v677 = vpop.f32.mrf.mxu0
    %v678 = vadd.f32 %v665, %v677
    %v679 = vpop.f32.mrf.mxu0
    %680 = vdwg.mxu0
    %v681 = vmax.f32 %v600, 0.0
    %v682 = vmax.f32 %v626, 0.0
    %v683 = vmax.f32 %v652, 0.0
    %v684 = vmax.f32 %v678, 0.0
    %v685 = vld [vmem:[#allocation5] sm:$0xff]
    %v686 = vld [vmem:[#allocation5 + $0x8] sm:$0xff]
    %v687 = vld [vmem:[#allocation5 + $0x10] sm:$0xff]
    %v688 = vld [vmem:[#allocation5 + $0x18] sm:$0xff]
    %v689 = vld [vmem:[#allocation5 + $0x20] sm:$0xff]
    %v690 = vld [vmem:[#allocation5 + $0x28] sm:$0xff]
    %v691 = vld [vmem:[#allocation5 + $0x30] sm:$0xff]
    %v692 = vld [vmem:[#allocation5 + $0x38] sm:$0xff]
    %v693 = vld [vmem:[#allocation5 + $0x40] sm:$0xff]
    %v694 = vld [vmem:[#allocation5 + $0x48] sm:$0xff]
    %v695 = vld [vmem:[#allocation5 + $0x50] sm:$0xff]
    %v696 = vld [vmem:[#allocation5 + $0x58] sm:$0xff]
    %v697 = vld [vmem:[#allocation5 + $0x60] sm:$0xff]
    %v698 = vld [vmem:[#allocation5 + $0x68] sm:$0xff]
    %v699 = vld [vmem:[#allocation5 + $0x70] sm:$0xff]
    %v700 = vld [vmem:[#allocation5 + $0x78] sm:$0xff]
    %v701 = vld [vmem:[#allocation5 + $0x80] sm:$0xff]
    %v702 = vld [vmem:[#allocation5 + $0x88] sm:$0xff]
    %v703 = vld [vmem:[#allocation5 + $0x90] sm:$0xff]
    %v704 = vld [vmem:[#allocation5 + $0x98] sm:$0xff]
    %v705 = vld [vmem:[#allocation5 + $0xa0] sm:$0xff]
    %v706 = vld [vmem:[#allocation5 + $0xa8] sm:$0xff]
    %v707 = vld [vmem:[#allocation5 + $0xb0] sm:$0xff]
    %v708 = vld [vmem:[#allocation5 + $0xb8] sm:$0xff]
    %v709 = vld [vmem:[#allocation5 + $0xc0] sm:$0xff]
    %v710 = vld [vmem:[#allocation5 + $0xc8] sm:$0xff]
    %v711 = vld [vmem:[#allocation5 + $0xd0] sm:$0xff]
    %v712 = vld [vmem:[#allocation5 + $0xd8] sm:$0xff]
    %v713 = vld [vmem:[#allocation5 + $0xe0] sm:$0xff]
    %v714 = vld [vmem:[#allocation5 + $0xe8] sm:$0xff]
    %v715 = vld [vmem:[#allocation5 + $0xf0] sm:$0xff]
    %v716 = vld [vmem:[#allocation5 + $0xf8] sm:$0xff]
    %v717 = vld [vmem:[#allocation5 + $0x100] sm:$0xff]
    %v718 = vld [vmem:[#allocation5 + $0x108] sm:$0xff]
    %v719 = vld [vmem:[#allocation5 + $0x110] sm:$0xff]
    %v720 = vld [vmem:[#allocation5 + $0x118] sm:$0xff]
    %v721 = vld [vmem:[#allocation5 + $0x120] sm:$0xff]
    %v722 = vld [vmem:[#allocation5 + $0x128] sm:$0xff]
    %v723 = vld [vmem:[#allocation5 + $0x130] sm:$0xff]
    %v724 = vld [vmem:[#allocation5 + $0x138] sm:$0xff]
    %v725 = vld [vmem:[#allocation5 + $0x140] sm:$0xff]
    %v726 = vld [vmem:[#allocation5 + $0x148] sm:$0xff]
    %v727 = vld [vmem:[#allocation5 + $0x150] sm:$0xff]
    %v728 = vld [vmem:[#allocation5 + $0x158] sm:$0xff]
    %v729 = vld [vmem:[#allocation5 + $0x160] sm:$0xff]
    %v730 = vld [vmem:[#allocation5 + $0x168] sm:$0xff]
    %v731 = vld [vmem:[#allocation5 + $0x170] sm:$0xff]
    %v732 = vld [vmem:[#allocation5 + $0x178] sm:$0xff]
    %v733 = vld [vmem:[#allocation5 + $0x180] sm:$0xff]
    %v734 = vld [vmem:[#allocation5 + $0x188] sm:$0xff]
    %v735 = vld [vmem:[#allocation5 + $0x190] sm:$0xff]
    %v736 = vld [vmem:[#allocation5 + $0x198] sm:$0xff]
    %v737 = vld [vmem:[#allocation5 + $0x1a0] sm:$0xff]
    %v738 = vld [vmem:[#allocation5 + $0x1a8] sm:$0xff]
    %v739 = vld [vmem:[#allocation5 + $0x1b0] sm:$0xff]
    %v740 = vld [vmem:[#allocation5 + $0x1b8] sm:$0xff]
    %v741 = vld [vmem:[#allocation5 + $0x1c0] sm:$0xff]
    %v742 = vld [vmem:[#allocation5 + $0x1c8] sm:$0xff]
    %v743 = vld [vmem:[#allocation5 + $0x1d0] sm:$0xff]
    %v744 = vld [vmem:[#allocation5 + $0x1d8] sm:$0xff]
    %v745 = vld [vmem:[#allocation5 + $0x1e0] sm:$0xff]
    %v746 = vld [vmem:[#allocation5 + $0x1e8] sm:$0xff]
    %v747 = vld [vmem:[#allocation5 + $0x1f0] sm:$0xff]
    %v748 = vld [vmem:[#allocation5 + $0x1f8] sm:$0xff]
    %v749 = vpack.c.bf16 %v681, %v681
    %v750 = vpack.c.bf16 %v682, %v682
    %v751 = vpack.c.bf16 %v683, %v683
    %v752 = vpack.c.bf16 %v684, %v684
    %s753 = scalar_lea.vmem [#allocation16], 1
    %v754 = vld [vmem:[%s753] ss:$8 sm:$0x3]
    %v756 = vperm.slane %v754, 0
    %v757 = vperm.slane %v754, 1
    %v824 = vunpack.c.l.b16 %v685
    %v825 = vunpack.c.h.b16 %v685
    %v826 = vunpack.c.l.b16 %v686
    %v827 = vunpack.c.h.b16 %v686
    %v828 = vunpack.c.l.b16 %v687
    %v829 = vunpack.c.h.b16 %v687
    %v830 = vunpack.c.l.b16 %v688
    %v831 = vunpack.c.h.b16 %v688
    %v832 = vunpack.c.l.b16 %v689
    %v833 = vunpack.c.h.b16 %v689
    %v834 = vunpack.c.l.b16 %v690
    %v835 = vunpack.c.h.b16 %v690
    %v836 = vunpack.c.l.b16 %v691
    %v837 = vunpack.c.h.b16 %v691
    %v838 = vunpack.c.l.b16 %v692
    %v839 = vunpack.c.h.b16 %v692
    %v840 = vunpack.c.l.b16 %v693
    %v841 = vunpack.c.h.b16 %v693
    %v842 = vunpack.c.l.b16 %v694
    %v843 = vunpack.c.h.b16 %v694
    %v844 = vunpack.c.l.b16 %v695
    %v845 = vunpack.c.h.b16 %v695
    %v846 = vunpack.c.l.b16 %v696
    %v847 = vunpack.c.h.b16 %v696
    %v848 = vunpack.c.l.b16 %v697
    %v849 = vunpack.c.h.b16 %v697
    %v850 = vunpack.c.l.b16 %v698
    %v851 = vunpack.c.h.b16 %v698
    %v852 = vunpack.c.l.b16 %v699
    %v853 = vunpack.c.h.b16 %v699
    %v854 = vunpack.c.l.b16 %v700
    %v855 = vunpack.c.h.b16 %v700
    %v856 = vunpack.c.l.b16 %v701
    %v857 = vunpack.c.h.b16 %v701
    %v858 = vunpack.c.l.b16 %v702
    %v859 = vunpack.c.h.b16 %v702
    %v860 = vunpack.c.l.b16 %v703
    %v861 = vunpack.c.h.b16 %v703
    %v862 = vunpack.c.l.b16 %v704
    %v863 = vunpack.c.h.b16 %v704
    %v864 = vunpack.c.l.b16 %v705
    %v865 = vunpack.c.h.b16 %v705
    %v866 = vunpack.c.l.b16 %v706
    %v867 = vunpack.c.h.b16 %v706
    %v868 = vunpack.c.l.b16 %v707
    %v869 = vunpack.c.h.b16 %v707
    %v870 = vunpack.c.l.b16 %v708
    %v871 = vunpack.c.h.b16 %v708
    %v872 = vunpack.c.l.b16 %v709
    %v873 = vunpack.c.h.b16 %v709
    %v874 = vunpack.c.l.b16 %v710
    %v875 = vunpack.c.h.b16 %v710
    %v876 = vunpack.c.l.b16 %v711
    %v877 = vunpack.c.h.b16 %v711
    %v878 = vunpack.c.l.b16 %v712
    %v879 = vunpack.c.h.b16 %v712
    %v880 = vunpack.c.l.b16 %v713
    %v881 = vunpack.c.h.b16 %v713
    %v882 = vunpack.c.l.b16 %v714
    %v883 = vunpack.c.h.b16 %v714
    %v884 = vunpack.c.l.b16 %v715
    %v885 = vunpack.c.h.b16 %v715
    %v886 = vunpack.c.l.b16 %v716
    %v887 = vunpack.c.h.b16 %v716
    %v888 = vunpack.c.l.b16 %v717
    %v889 = vunpack.c.h.b16 %v717
    %v890 = vunpack.c.l.b16 %v718
    %v891 = vunpack.c.h.b16 %v718
    %v892 = vunpack.c.l.b16 %v719
    %v893 = vunpack.c.h.b16 %v719
    %v894 = vunpack.c.l.b16 %v720
    %v895 = vunpack.c.h.b16 %v720
    %v896 = vunpack.c.l.b16 %v721
    %v897 = vunpack.c.h.b16 %v721
    %v898 = vunpack.c.l.b16 %v722
    %v899 = vunpack.c.h.b16 %v722
    %v900 = vunpack.c.l.b16 %v723
    %v901 = vunpack.c.h.b16 %v723
    %v902 = vunpack.c.l.b16 %v724
    %v903 = vunpack.c.h.b16 %v724
    %v904 = vunpack.c.l.b16 %v725
    %v905 = vunpack.c.h.b16 %v725
    %v906 = vunpack.c.l.b16 %v726
    %v907 = vunpack.c.h.b16 %v726
    %v908 = vunpack.c.l.b16 %v727
    %v909 = vunpack.c.h.b16 %v727
    %v910 = vunpack.c.l.b16 %v728
    %v911 = vunpack.c.h.b16 %v728
    %v912 = vunpack.c.l.b16 %v729
    %v913 = vunpack.c.h.b16 %v729
    %v914 = vunpack.c.l.b16 %v730
    %v915 = vunpack.c.h.b16 %v730
    %v916 = vunpack.c.l.b16 %v731
    %v917 = vunpack.c.h.b16 %v731
    %v918 = vunpack.c.l.b16 %v732
    %v919 = vunpack.c.h.b16 %v732
    %v920 = vunpack.c.l.b16 %v733
    %v921 = vunpack.c.h.b16 %v733
    %v922 = vunpack.c.l.b16 %v734
    %v923 = vunpack.c.h.b16 %v734
    %v924 = vunpack.c.l.b16 %v735
    %v925 = vunpack.c.h.b16 %v735
    %v926 = vunpack.c.l.b16 %v736
    %v927 = vunpack.c.h.b16 %v736
    %v928 = vunpack.c.l.b16 %v737
    %v929 = vunpack.c.h.b16 %v737
    %v930 = vunpack.c.l.b16 %v738
    %v931 = vunpack.c.h.b16 %v738
    %v932 = vunpack.c.l.b16 %v739
    %v933 = vunpack.c.h.b16 %v739
    %v934 = vunpack.c.l.b16 %v740
    %v935 = vunpack.c.h.b16 %v740
    %v936 = vunpack.c.l.b16 %v741
    %v937 = vunpack.c.h.b16 %v741
    %v938 = vunpack.c.l.b16 %v742
    %v939 = vunpack.c.h.b16 %v742
    %v940 = vunpack.c.l.b16 %v743
    %v941 = vunpack.c.h.b16 %v743
    %v942 = vunpack.c.l.b16 %v744
    %v943 = vunpack.c.h.b16 %v744
    %v944 = vunpack.c.l.b16 %v745
    %v945 = vunpack.c.h.b16 %v745
    %v946 = vunpack.c.l.b16 %v746
    %v947 = vunpack.c.h.b16 %v746
    %v948 = vunpack.c.l.b16 %v747
    %v949 = vunpack.c.h.b16 %v747
    %v950 = vunpack.c.l.b16 %v748
    %v951 = vunpack.c.h.b16 %v748
    %v952 = vpack.c.b16 %v826, %v824
    %v953 = vpack.c.b16 %v827, %v825
    %v954 = vpack.c.b16 %v830, %v828
    %v955 = vpack.c.b16 %v831, %v829
    %v956 = vpack.c.b16 %v834, %v832
    %v957 = vpack.c.b16 %v835, %v833
    %v958 = vpack.c.b16 %v838, %v836
    %v959 = vpack.c.b16 %v839, %v837
    %v960 = vpack.c.b16 %v842, %v840
    %v961 = vpack.c.b16 %v843, %v841
    %v962 = vpack.c.b16 %v846, %v844
    %v963 = vpack.c.b16 %v847, %v845
    %v964 = vpack.c.b16 %v850, %v848
    %v965 = vpack.c.b16 %v851, %v849
    %v966 = vpack.c.b16 %v854, %v852
    %v967 = vpack.c.b16 %v855, %v853
    %v968 = vpack.c.b16 %v858, %v856
    %v969 = vpack.c.b16 %v859, %v857
    %v970 = vpack.c.b16 %v862, %v860
    %v971 = vpack.c.b16 %v863, %v861
    %v972 = vpack.c.b16 %v866, %v864
    %v973 = vpack.c.b16 %v867, %v865
    %v974 = vpack.c.b16 %v870, %v868
    %v975 = vpack.c.b16 %v871, %v869
    %v976 = vpack.c.b16 %v874, %v872
    %v977 = vpack.c.b16 %v875, %v873
    %v978 = vpack.c.b16 %v878, %v876
    %v979 = vpack.c.b16 %v879, %v877
    %v980 = vpack.c.b16 %v882, %v880
    %v981 = vpack.c.b16 %v883, %v881
    %v982 = vpack.c.b16 %v886, %v884
    %v983 = vpack.c.b16 %v887, %v885
    %v984 = vpack.c.b16 %v890, %v888
    %v985 = vpack.c.b16 %v891, %v889
    %v986 = vpack.c.b16 %v894, %v892
    %v987 = vpack.c.b16 %v895, %v893
    %v988 = vpack.c.b16 %v898, %v896
    %v989 = vpack.c.b16 %v899, %v897
    %v990 = vpack.c.b16 %v902, %v900
    %v991 = vpack.c.b16 %v903, %v901
    %v992 = vpack.c.b16 %v906, %v904
    %v993 = vpack.c.b16 %v907, %v905
    %v994 = vpack.c.b16 %v910, %v908
    %v995 = vpack.c.b16 %v911, %v909
    %v996 = vpack.c.b16 %v914, %v912
    %v997 = vpack.c.b16 %v915, %v913
    %v998 = vpack.c.b16 %v918, %v916
    %v999 = vpack.c.b16 %v919, %v917
    %v1000 = vpack.c.b16 %v922, %v920
    %v1001 = vpack.c.b16 %v923, %v921
    %v1002 = vpack.c.b16 %v926, %v924
    %v1003 = vpack.c.b16 %v927, %v925
    %v1004 = vpack.c.b16 %v930, %v928
    %v1005 = vpack.c.b16 %v931, %v929
    %v1006 = vpack.c.b16 %v934, %v932
    %v1007 = vpack.c.b16 %v935, %v933
    %v1008 = vpack.c.b16 %v938, %v936
    %v1009 = vpack.c.b16 %v939, %v937
    %v1010 = vpack.c.b16 %v942, %v940
    %v1011 = vpack.c.b16 %v943, %v941
    %v1012 = vpack.c.b16 %v946, %v944
    %v1013 = vpack.c.b16 %v947, %v945
    %v1014 = vpack.c.b16 %v950, %v948
    %v1015 = vpack.c.b16 %v951, %v949
    %1080 = vmatpush.bf16.msra.mxu0 %v966
    %1081 = vmatpush.bf16.msra.mxu0 %v964
    %1082 = vmatpush.bf16.msra.mxu0 %v962
    %1083 = vmatpush.bf16.msra.mxu0 %v960
    %1084 = vmatpush.bf16.msra.mxu0 %v958
    %1085 = vmatpush.bf16.msra.mxu0 %v956
    %1086 = vmatpush.bf16.msra.mxu0 %v954
    %1087 = vmatpush.bf16.msra.mxu0 %v952
    %1088 = vmatmul.bf16.gmra.mxu0 %v749
    %v1089 = vpop.f32.mrf.mxu0
    %v1090 = vadd.f32 %v756, %v1089
    %v1091 = vpop.f32.mrf.mxu0
    %1092 = vdwg.mxu0
    %1093 = vmatpush.bf16.msra.mxu0 %v982
    %1094 = vmatpush.bf16.msra.mxu0 %v980
    %1095 = vmatpush.bf16.msra.mxu0 %v978
    %1096 = vmatpush.bf16.msra.mxu0 %v976
    %1097 = vmatpush.bf16.msra.mxu0 %v974
    %1098 = vmatpush.bf16.msra.mxu0 %v972
    %1099 = vmatpush.bf16.msra.mxu0 %v970
    %1100 = vmatpush.bf16.msra.mxu0 %v968
    %1101 = vmatmul.bf16.gmra.mxu0 %v750
    %v1102 = vpop.f32.mrf.mxu0
    %v1103 = vadd.f32 %v1090, %v1102
    %v1104 = vpop.f32.mrf.mxu0
    %1105 = vdwg.mxu0
    %1106 = vmatpush.bf16.msra.mxu0 %v998
    %1107 = vmatpush.bf16.msra.mxu0 %v996
    %1108 = vmatpush.bf16.msra.mxu0 %v994
    %1109 = vmatpush.bf16.msra.mxu0 %v992
    %1110 = vmatpush.bf16.msra.mxu0 %v990
    %1111 = vmatpush.bf16.msra.mxu0 %v988
    %1112 = vmatpush.bf16.msra.mxu0 %v986
    %1113 = vmatpush.bf16.msra.mxu0 %v984
    %1114 = vmatmul.bf16.gmra.mxu0 %v751
    %v1115 = vpop.f32.mrf.mxu0
    %v1116 = vadd.f32 %v1103, %v1115
    %v1117 = vpop.f32.mrf.mxu0
    %1118 = vdwg.mxu0
    %1119 = vmatpush.bf16.msra.mxu0 %v1014
    %1120 = vmatpush.bf16.msra.mxu0 %v1012
    %1121 = vmatpush.bf16.msra.mxu0 %v1010
    %1122 = vmatpush.bf16.msra.mxu0 %v1008
    %1123 = vmatpush.bf16.msra.mxu0 %v1006
    %1124 = vmatpush.bf16.msra.mxu0 %v1004
    %1125 = vmatpush.bf16.msra.mxu0 %v1002
    %1126 = vmatpush.bf16.msra.mxu0 %v1000
    %1127 = vmatmul.bf16.gmra.mxu0 %v752
    %v1128 = vpop.f32.mrf.mxu0
    %v1129 = vadd.f32 %v1116, %v1128
    %v1130 = vpop.f32.mrf.mxu0
    %1131 = vdwg.mxu0
    %1132 = vmatpush.bf16.msra.mxu0 %v967
    %1133 = vmatpush.bf16.msra.mxu0 %v965
    %1134 = vmatpush.bf16.msra.mxu0 %v963
    %1135 = vmatpush.bf16.msra.mxu0 %v961
    %1136 = vmatpush.bf16.msra.mxu0 %v959
    %1137 = vmatpush.bf16.msra.mxu0 %v957
    %1138 = vmatpush.bf16.msra.mxu0 %v955
    %1139 = vmatpush.bf16.msra.mxu0 %v953
    %1140 = vmatmul.bf16.gmra.mxu0 %v749
    %v1141 = vpop.f32.mrf.mxu0
    %v1142 = vadd.f32 %v757, %v1141
    %v1143 = vpop.f32.mrf.mxu0
    %1144 = vdwg.mxu0
    %1145 = vmatpush.bf16.msra.mxu0 %v983
    %1146 = vmatpush.bf16.msra.mxu0 %v981
    %1147 = vmatpush.bf16.msra.mxu0 %v979
    %1148 = vmatpush.bf16.msra.mxu0 %v977
    %1149 = vmatpush.bf16.msra.mxu0 %v975
    %1150 = vmatpush.bf16.msra.mxu0 %v973
    %1151 = vmatpush.bf16.msra.mxu0 %v971
    %1152 = vmatpush.bf16.msra.mxu0 %v969
    %1153 = vmatmul.bf16.gmra.mxu0 %v750
    %v1154 = vpop.f32.mrf.mxu0
    %v1155 = vadd.f32 %v1142, %v1154
    %v1156 = vpop.f32.mrf.mxu0
    %1157 = vdwg.mxu0
    %1158 = vmatpush.bf16.msra.mxu0 %v999
    %1159 = vmatpush.bf16.msra.mxu0 %v997
    %1160 = vmatpush.bf16.msra.mxu0 %v995
    %1161 = vmatpush.bf16.msra.mxu0 %v993
    %1162 = vmatpush.bf16.msra.mxu0 %v991
    %1163 = vmatpush.bf16.msra.mxu0 %v989
    %1164 = vmatpush.bf16.msra.mxu0 %v987
    %1165 = vmatpush.bf16.msra.mxu0 %v985
    %1166 = vmatmul.bf16.gmra.mxu0 %v751
    %v1167 = vpop.f32.mrf.mxu0
    %v1168 = vadd.f32 %v1155, %v1167
    %v1169 = vpop.f32.mrf.mxu0
    %1170 = vdwg.mxu0
    %1171 = vmatpush.bf16.msra.mxu0 %v1015
    %1172 = vmatpush.bf16.msra.mxu0 %v1013
    %1173 = vmatpush.bf16.msra.mxu0 %v1011
    %1174 = vmatpush.bf16.msra.mxu0 %v1009
    %1175 = vmatpush.bf16.msra.mxu0 %v1007
    %1176 = vmatpush.bf16.msra.mxu0 %v1005
    %1177 = vmatpush.bf16.msra.mxu0 %v1003
    %1178 = vmatpush.bf16.msra.mxu0 %v1001
    %1179 = vmatmul.bf16.gmra.mxu0 %v752
    %v1180 = vpop.f32.mrf.mxu0
    %v1181 = vadd.f32 %v1168, %v1180
    %v1182 = vpop.f32.mrf.mxu0
    %1183 = vdwg.mxu0
    %v1184 = vmax.f32 %v1129, 0.0
    %v1185 = vmax.f32 %v1181, 0.0
    %v1186 = vld [vmem:[#allocation7] sm:$0xff]
    %v1187 = vld [vmem:[#allocation7 + $0x8] sm:$0xff]
    %v1188 = vld [vmem:[#allocation7 + $0x10] sm:$0xff]
    %v1189 = vld [vmem:[#allocation7 + $0x18] sm:$0xff]
    %v1190 = vld [vmem:[#allocation7 + $0x20] sm:$0xff]
    %v1191 = vld [vmem:[#allocation7 + $0x28] sm:$0xff]
    %v1192 = vld [vmem:[#allocation7 + $0x30] sm:$0xff]
    %v1193 = vld [vmem:[#allocation7 + $0x38] sm:$0xff]
    %v1194 = vld [vmem:[#allocation7 + $0x40] sm:$0xff]
    %v1195 = vld [vmem:[#allocation7 + $0x48] sm:$0xff]
    %v1196 = vld [vmem:[#allocation7 + $0x50] sm:$0xff]
    %v1197 = vld [vmem:[#allocation7 + $0x58] sm:$0xff]
    %v1198 = vld [vmem:[#allocation7 + $0x60] sm:$0xff]
    %v1199 = vld [vmem:[#allocation7 + $0x68] sm:$0xff]
    %v1200 = vld [vmem:[#allocation7 + $0x70] sm:$0xff]
    %v1201 = vld [vmem:[#allocation7 + $0x78] sm:$0xff]
    %v1202 = vld [vmem:[#allocation7 + $0x80] sm:$0xff]
    %v1203 = vld [vmem:[#allocation7 + $0x88] sm:$0xff]
    %v1204 = vld [vmem:[#allocation7 + $0x90] sm:$0xff]
    %v1205 = vld [vmem:[#allocation7 + $0x98] sm:$0xff]
    %v1206 = vld [vmem:[#allocation7 + $0xa0] sm:$0xff]
    %v1207 = vld [vmem:[#allocation7 + $0xa8] sm:$0xff]
    %v1208 = vld [vmem:[#allocation7 + $0xb0] sm:$0xff]
    %v1209 = vld [vmem:[#allocation7 + $0xb8] sm:$0xff]
    %v1210 = vld [vmem:[#allocation7 + $0xc0] sm:$0xff]
    %v1211 = vld [vmem:[#allocation7 + $0xc8] sm:$0xff]
    %v1212 = vld [vmem:[#allocation7 + $0xd0] sm:$0xff]
    %v1213 = vld [vmem:[#allocation7 + $0xd8] sm:$0xff]
    %v1214 = vld [vmem:[#allocation7 + $0xe0] sm:$0xff]
    %v1215 = vld [vmem:[#allocation7 + $0xe8] sm:$0xff]
    %v1216 = vld [vmem:[#allocation7 + $0xf0] sm:$0xff]
    %v1217 = vld [vmem:[#allocation7 + $0xf8] sm:$0xff]
    %v1218 = vpack.c.bf16 %v1184, %v1184
    %v1219 = vpack.c.bf16 %v1185, %v1185
    %s1220 = scalar_lea.vmem [#allocation16], 2
    %v1221 = vld [vmem:[%s1220] ss:$8 sm:$0x3]
    %v1223 = vperm.slane %v1221, 0
    %v1224 = vperm.slane %v1221, 1
    %v1259 = vunpack.c.l.b16 %v1186
    %v1260 = vunpack.c.h.b16 %v1186
    %v1261 = vunpack.c.l.b16 %v1187
    %v1262 = vunpack.c.h.b16 %v1187
    %v1263 = vunpack.c.l.b16 %v1188
    %v1264 = vunpack.c.h.b16 %v1188
    %v1265 = vunpack.c.l.b16 %v1189
    %v1266 = vunpack.c.h.b16 %v1189
    %v1267 = vunpack.c.l.b16 %v1190
    %v1268 = vunpack.c.h.b16 %v1190
    %v1269 = vunpack.c.l.b16 %v1191
    %v1270 = vunpack.c.h.b16 %v1191
    %v1271 = vunpack.c.l.b16 %v1192
    %v1272 = vunpack.c.h.b16 %v1192
    %v1273 = vunpack.c.l.b16 %v1193
    %v1274 = vunpack.c.h.b16 %v1193
    %v1275 = vunpack.c.l.b16 %v1194
    %v1276 = vunpack.c.h.b16 %v1194
    %v1277 = vunpack.c.l.b16 %v1195
    %v1278 = vunpack.c.h.b16 %v1195
    %v1279 = vunpack.c.l.b16 %v1196
    %v1280 = vunpack.c.h.b16 %v1196
    %v1281 = vunpack.c.l.b16 %v1197
    %v1282 = vunpack.c.h.b16 %v1197
    %v1283 = vunpack.c.l.b16 %v1198
    %v1284 = vunpack.c.h.b16 %v1198
    %v1285 = vunpack.c.l.b16 %v1199
    %v1286 = vunpack.c.h.b16 %v1199
    %v1287 = vunpack.c.l.b16 %v1200
    %v1288 = vunpack.c.h.b16 %v1200
    %v1289 = vunpack.c.l.b16 %v1201
    %v1290 = vunpack.c.h.b16 %v1201
    %v1291 = vunpack.c.l.b16 %v1202
    %v1292 = vunpack.c.h.b16 %v1202
    %v1293 = vunpack.c.l.b16 %v1203
    %v1294 = vunpack.c.h.b16 %v1203
    %v1295 = vunpack.c.l.b16 %v1204
    %v1296 = vunpack.c.h.b16 %v1204
    %v1297 = vunpack.c.l.b16 %v1205
    %v1298 = vunpack.c.h.b16 %v1205
    %v1299 = vunpack.c.l.b16 %v1206
    %v1300 = vunpack.c.h.b16 %v1206
    %v1301 = vunpack.c.l.b16 %v1207
    %v1302 = vunpack.c.h.b16 %v1207
    %v1303 = vunpack.c.l.b16 %v1208
    %v1304 = vunpack.c.h.b16 %v1208
    %v1305 = vunpack.c.l.b16 %v1209
    %v1306 = vunpack.c.h.b16 %v1209
    %v1307 = vunpack.c.l.b16 %v1210
    %v1308 = vunpack.c.h.b16 %v1210
    %v1309 = vunpack.c.l.b16 %v1211
    %v1310 = vunpack.c.h.b16 %v1211
    %v1311 = vunpack.c.l.b16 %v1212
    %v1312 = vunpack.c.h.b16 %v1212
    %v1313 = vunpack.c.l.b16 %v1213
    %v1314 = vunpack.c.h.b16 %v1213
    %v1315 = vunpack.c.l.b16 %v1214
    %v1316 = vunpack.c.h.b16 %v1214
    %v1317 = vunpack.c.l.b16 %v1215
    %v1318 = vunpack.c.h.b16 %v1215
    %v1319 = vunpack.c.l.b16 %v1216
    %v1320 = vunpack.c.h.b16 %v1216
    %v1321 = vunpack.c.l.b16 %v1217
    %v1322 = vunpack.c.h.b16 %v1217
    %v1323 = vpack.c.b16 %v1261, %v1259
    %v1324 = vpack.c.b16 %v1262, %v1260
    %v1325 = vpack.c.b16 %v1265, %v1263
    %v1326 = vpack.c.b16 %v1266, %v1264
    %v1327 = vpack.c.b16 %v1269, %v1267
    %v1328 = vpack.c.b16 %v1270, %v1268
    %v1329 = vpack.c.b16 %v1273, %v1271
    %v1330 = vpack.c.b16 %v1274, %v1272
    %v1331 = vpack.c.b16 %v1277, %v1275
    %v1332 = vpack.c.b16 %v1278, %v1276
    %v1333 = vpack.c.b16 %v1281, %v1279
    %v1334 = vpack.c.b16 %v1282, %v1280
    %v1335 = vpack.c.b16 %v1285, %v1283
    %v1336 = vpack.c.b16 %v1286, %v1284
    %v1337 = vpack.c.b16 %v1289, %v1287
    %v1338 = vpack.c.b16 %v1290, %v1288
    %v1339 = vpack.c.b16 %v1293, %v1291
    %v1340 = vpack.c.b16 %v1294, %v1292
    %v1341 = vpack.c.b16 %v1297, %v1295
    %v1342 = vpack.c.b16 %v1298, %v1296
    %v1343 = vpack.c.b16 %v1301, %v1299
    %v1344 = vpack.c.b16 %v1302, %v1300
    %v1345 = vpack.c.b16 %v1305, %v1303
    %v1346 = vpack.c.b16 %v1306, %v1304
    %v1347 = vpack.c.b16 %v1309, %v1307
    %v1348 = vpack.c.b16 %v1310, %v1308
    %v1349 = vpack.c.b16 %v1313, %v1311
    %v1350 = vpack.c.b16 %v1314, %v1312
    %v1351 = vpack.c.b16 %v1317, %v1315
    %v1352 = vpack.c.b16 %v1318, %v1316
    %v1353 = vpack.c.b16 %v1321, %v1319
    %v1354 = vpack.c.b16 %v1322, %v1320
    %1387 = vmatpush.bf16.msra.mxu0 %v1337
    %1388 = vmatpush.bf16.msra.mxu0 %v1335
    %1389 = vmatpush.bf16.msra.mxu0 %v1333
    %1390 = vmatpush.bf16.msra.mxu0 %v1331
    %1391 = vmatpush.bf16.msra.mxu0 %v1329
    %1392 = vmatpush.bf16.msra.mxu0 %v1327
    %1393 = vmatpush.bf16.msra.mxu0 %v1325
    %1394 = vmatpush.bf16.msra.mxu0 %v1323
    %1395 = vmatmul.bf16.gmra.mxu0 %v1218
    %v1396 = vpop.f32.mrf.mxu0
    %v1397 = vadd.f32 %v1223, %v1396
    %v1398 = vpop.f32.mrf.mxu0
    %1399 = vdwg.mxu0
    %1400 = vmatpush.bf16.msra.mxu0 %v1353
    %1401 = vmatpush.bf16.msra.mxu0 %v1351
    %1402 = vmatpush.bf16.msra.mxu0 %v1349
    %1403 = vmatpush.bf16.msra.mxu0 %v1347
    %1404 = vmatpush.bf16.msra.mxu0 %v1345
    %1405 = vmatpush.bf16.msra.mxu0 %v1343
    %1406 = vmatpush.bf16.msra.mxu0 %v1341
    %1407 = vmatpush.bf16.msra.mxu0 %v1339
    %1408 = vmatmul.bf16.gmra.mxu0 %v1219
    %v1409 = vpop.f32.mrf.mxu0
    %v1410 = vadd.f32 %v1397, %v1409
    %v1411 = vpop.f32.mrf.mxu0
    %1412 = vdwg.mxu0
    %1413 = vmatpush.bf16.msra.mxu0 %v1338
    %1414 = vmatpush.bf16.msra.mxu0 %v1336
    %1415 = vmatpush.bf16.msra.mxu0 %v1334
    %1416 = vmatpush.bf16.msra.mxu0 %v1332
    %1417 = vmatpush.bf16.msra.mxu0 %v1330
    %1418 = vmatpush.bf16.msra.mxu0 %v1328
    %1419 = vmatpush.bf16.msra.mxu0 %v1326
    %1420 = vmatpush.bf16.msra.mxu0 %v1324
    %1421 = vmatmul.bf16.gmra.mxu0 %v1218
    %v1422 = vpop.f32.mrf.mxu0
    %v1423 = vadd.f32 %v1224, %v1422
    %v1424 = vpop.f32.mrf.mxu0
    %1425 = vdwg.mxu0
    %1426 = vmatpush.bf16.msra.mxu0 %v1354
    %1427 = vmatpush.bf16.msra.mxu0 %v1352
    %1428 = vmatpush.bf16.msra.mxu0 %v1350
    %1429 = vmatpush.bf16.msra.mxu0 %v1348
    %1430 = vmatpush.bf16.msra.mxu0 %v1346
    %1431 = vmatpush.bf16.msra.mxu0 %v1344
    %1432 = vmatpush.bf16.msra.mxu0 %v1342
    %1433 = vmatpush.bf16.msra.mxu0 %v1340
    %1434 = vmatmul.bf16.gmra.mxu0 %v1219
    %v1435 = vpop.f32.mrf.mxu0
    %v1436 = vadd.f32 %v1423, %v1435
    %v1437 = vpop.f32.mrf.mxu0
    %1438 = vdwg.mxu0
    %v1439 = vmax.f32 %v1410, 0.0
    %v1440 = vmax.f32 %v1436, 0.0
    %v1441 = vld [vmem:[#allocation8] sm:$0xff]
    %v1442 = vld [vmem:[#allocation8 + $0x8] sm:$0xff]
    %v1443 = vld [vmem:[#allocation8 + $0x10] sm:$0xff]
    %v1444 = vld [vmem:[#allocation8 + $0x18] sm:$0xff]
    %v1445 = vld [vmem:[#allocation8 + $0x20] sm:$0xff]
    %v1446 = vld [vmem:[#allocation8 + $0x28] sm:$0xff]
    %v1447 = vld [vmem:[#allocation8 + $0x30] sm:$0xff]
    %v1448 = vld [vmem:[#allocation8 + $0x38] sm:$0xff]
    %v1449 = vld [vmem:[#allocation8 + $0x40] sm:$0xff]
    %v1450 = vld [vmem:[#allocation8 + $0x48] sm:$0xff]
    %v1451 = vld [vmem:[#allocation8 + $0x50] sm:$0xff]
    %v1452 = vld [vmem:[#allocation8 + $0x58] sm:$0xff]
    %v1453 = vld [vmem:[#allocation8 + $0x60] sm:$0xff]
    %v1454 = vld [vmem:[#allocation8 + $0x68] sm:$0xff]
    %v1455 = vld [vmem:[#allocation8 + $0x70] sm:$0xff]
    %v1456 = vld [vmem:[#allocation8 + $0x78] sm:$0xff]
    %v1457 = vld [vmem:[#allocation8 + $0x80] sm:$0xff]
    %v1458 = vld [vmem:[#allocation8 + $0x88] sm:$0xff]
    %v1459 = vld [vmem:[#allocation8 + $0x90] sm:$0xff]
    %v1460 = vld [vmem:[#allocation8 + $0x98] sm:$0xff]
    %v1461 = vld [vmem:[#allocation8 + $0xa0] sm:$0xff]
    %v1462 = vld [vmem:[#allocation8 + $0xa8] sm:$0xff]
    %v1463 = vld [vmem:[#allocation8 + $0xb0] sm:$0xff]
    %v1464 = vld [vmem:[#allocation8 + $0xb8] sm:$0xff]
    %v1465 = vld [vmem:[#allocation8 + $0xc0] sm:$0xff]
    %v1466 = vld [vmem:[#allocation8 + $0xc8] sm:$0xff]
    %v1467 = vld [vmem:[#allocation8 + $0xd0] sm:$0xff]
    %v1468 = vld [vmem:[#allocation8 + $0xd8] sm:$0xff]
    %v1469 = vld [vmem:[#allocation8 + $0xe0] sm:$0xff]
    %v1470 = vld [vmem:[#allocation8 + $0xe8] sm:$0xff]
    %v1471 = vld [vmem:[#allocation8 + $0xf0] sm:$0xff]
    %v1472 = vld [vmem:[#allocation8 + $0xf8] sm:$0xff]
    %v1473 = vpack.c.bf16 %v1439, %v1439
    %v1474 = vpack.c.bf16 %v1440, %v1440
    %s1475 = scalar_lea.vmem [#allocation16], 3
    %v1476 = vld [vmem:[%s1475] ss:$8 sm:$0x3]
    %v1478 = vperm.slane %v1476, 0
    %v1479 = vperm.slane %v1476, 1
    %v1514 = vunpack.c.l.b16 %v1441
    %v1515 = vunpack.c.h.b16 %v1441
    %v1516 = vunpack.c.l.b16 %v1442
    %v1517 = vunpack.c.h.b16 %v1442
    %v1518 = vunpack.c.l.b16 %v1443
    %v1519 = vunpack.c.h.b16 %v1443
    %v1520 = vunpack.c.l.b16 %v1444
    %v1521 = vunpack.c.h.b16 %v1444
    %v1522 = vunpack.c.l.b16 %v1445
    %v1523 = vunpack.c.h.b16 %v1445
    %v1524 = vunpack.c.l.b16 %v1446
    %v1525 = vunpack.c.h.b16 %v1446
    %v1526 = vunpack.c.l.b16 %v1447
    %v1527 = vunpack.c.h.b16 %v1447
    %v1528 = vunpack.c.l.b16 %v1448
    %v1529 = vunpack.c.h.b16 %v1448
    %v1530 = vunpack.c.l.b16 %v1449
    %v1531 = vunpack.c.h.b16 %v1449
    %v1532 = vunpack.c.l.b16 %v1450
    %v1533 = vunpack.c.h.b16 %v1450
    %v1534 = vunpack.c.l.b16 %v1451
    %v1535 = vunpack.c.h.b16 %v1451
    %v1536 = vunpack.c.l.b16 %v1452
    %v1537 = vunpack.c.h.b16 %v1452
    %v1538 = vunpack.c.l.b16 %v1453
    %v1539 = vunpack.c.h.b16 %v1453
    %v1540 = vunpack.c.l.b16 %v1454
    %v1541 = vunpack.c.h.b16 %v1454
    %v1542 = vunpack.c.l.b16 %v1455
    %v1543 = vunpack.c.h.b16 %v1455
    %v1544 = vunpack.c.l.b16 %v1456
    %v1545 = vunpack.c.h.b16 %v1456
    %v1546 = vunpack.c.l.b16 %v1457
    %v1547 = vunpack.c.h.b16 %v1457
    %v1548 = vunpack.c.l.b16 %v1458
    %v1549 = vunpack.c.h.b16 %v1458
    %v1550 = vunpack.c.l.b16 %v1459
    %v1551 = vunpack.c.h.b16 %v1459
    %v1552 = vunpack.c.l.b16 %v1460
    %v1553 = vunpack.c.h.b16 %v1460
    %v1554 = vunpack.c.l.b16 %v1461
    %v1555 = vunpack.c.h.b16 %v1461
    %v1556 = vunpack.c.l.b16 %v1462
    %v1557 = vunpack.c.h.b16 %v1462
    %v1558 = vunpack.c.l.b16 %v1463
    %v1559 = vunpack.c.h.b16 %v1463
    %v1560 = vunpack.c.l.b16 %v1464
    %v1561 = vunpack.c.h.b16 %v1464
    %v1562 = vunpack.c.l.b16 %v1465
    %v1563 = vunpack.c.h.b16 %v1465
    %v1564 = vunpack.c.l.b16 %v1466
    %v1565 = vunpack.c.h.b16 %v1466
    %v1566 = vunpack.c.l.b16 %v1467
    %v1567 = vunpack.c.h.b16 %v1467
    %v1568 = vunpack.c.l.b16 %v1468
    %v1569 = vunpack.c.h.b16 %v1468
    %v1570 = vunpack.c.l.b16 %v1469
    %v1571 = vunpack.c.h.b16 %v1469
    %v1572 = vunpack.c.l.b16 %v1470
    %v1573 = vunpack.c.h.b16 %v1470
    %v1574 = vunpack.c.l.b16 %v1471
    %v1575 = vunpack.c.h.b16 %v1471
    %v1576 = vunpack.c.l.b16 %v1472
    %v1577 = vunpack.c.h.b16 %v1472
    %v1578 = vpack.c.b16 %v1516, %v1514
    %v1579 = vpack.c.b16 %v1517, %v1515
    %v1580 = vpack.c.b16 %v1520, %v1518
    %v1581 = vpack.c.b16 %v1521, %v1519
    %v1582 = vpack.c.b16 %v1524, %v1522
    %v1583 = vpack.c.b16 %v1525, %v1523
    %v1584 = vpack.c.b16 %v1528, %v1526
    %v1585 = vpack.c.b16 %v1529, %v1527
    %v1586 = vpack.c.b16 %v1532, %v1530
    %v1587 = vpack.c.b16 %v1533, %v1531
    %v1588 = vpack.c.b16 %v1536, %v1534
    %v1589 = vpack.c.b16 %v1537, %v1535
    %v1590 = vpack.c.b16 %v1540, %v1538
    %v1591 = vpack.c.b16 %v1541, %v1539
    %v1592 = vpack.c.b16 %v1544, %v1542
    %v1593 = vpack.c.b16 %v1545, %v1543
    %v1594 = vpack.c.b16 %v1548, %v1546
    %v1595 = vpack.c.b16 %v1549, %v1547
    %v1596 = vpack.c.b16 %v1552, %v1550
    %v1597 = vpack.c.b16 %v1553, %v1551
    %v1598 = vpack.c.b16 %v1556, %v1554
    %v1599 = vpack.c.b16 %v1557, %v1555
    %v1600 = vpack.c.b16 %v1560, %v1558
    %v1601 = vpack.c.b16 %v1561, %v1559
    %v1602 = vpack.c.b16 %v1564, %v1562
    %v1603 = vpack.c.b16 %v1565, %v1563
    %v1604 = vpack.c.b16 %v1568, %v1566
    %v1605 = vpack.c.b16 %v1569, %v1567
    %v1606 = vpack.c.b16 %v1572, %v1570
    %v1607 = vpack.c.b16 %v1573, %v1571
    %v1608 = vpack.c.b16 %v1576, %v1574
    %v1609 = vpack.c.b16 %v1577, %v1575
    %1642 = vmatpush.bf16.msra.mxu0 %v1592
    %1643 = vmatpush.bf16.msra.mxu0 %v1590
    %1644 = vmatpush.bf16.msra.mxu0 %v1588
    %1645 = vmatpush.bf16.msra.mxu0 %v1586
    %1646 = vmatpush.bf16.msra.mxu0 %v1584
    %1647 = vmatpush.bf16.msra.mxu0 %v1582
    %1648 = vmatpush.bf16.msra.mxu0 %v1580
    %1649 = vmatpush.bf16.msra.mxu0 %v1578
    %1650 = vmatmul.bf16.gmra.mxu0 %v1473
    %v1651 = vpop.f32.mrf.mxu0
    %v1652 = vadd.f32 %v1478, %v1651
    %v1653 = vpop.f32.mrf.mxu0
    %1654 = vdwg.mxu0
    %1655 = vmatpush.bf16.msra.mxu0 %v1608
    %1656 = vmatpush.bf16.msra.mxu0 %v1606
    %1657 = vmatpush.bf16.msra.mxu0 %v1604
    %1658 = vmatpush.bf16.msra.mxu0 %v1602
    %1659 = vmatpush.bf16.msra.mxu0 %v1600
    %1660 = vmatpush.bf16.msra.mxu0 %v1598
    %1661 = vmatpush.bf16.msra.mxu0 %v1596
    %1662 = vmatpush.bf16.msra.mxu0 %v1594
    %1663 = vmatmul.bf16.gmra.mxu0 %v1474
    %v1664 = vpop.f32.mrf.mxu0
    %v1665 = vadd.f32 %v1652, %v1664
    %v1666 = vpop.f32.mrf.mxu0
    %1667 = vdwg.mxu0
    %1668 = vmatpush.bf16.msra.mxu0 %v1593
    %1669 = vmatpush.bf16.msra.mxu0 %v1591
    %1670 = vmatpush.bf16.msra.mxu0 %v1589
    %1671 = vmatpush.bf16.msra.mxu0 %v1587
    %1672 = vmatpush.bf16.msra.mxu0 %v1585
    %1673 = vmatpush.bf16.msra.mxu0 %v1583
    %1674 = vmatpush.bf16.msra.mxu0 %v1581
    %1675 = vmatpush.bf16.msra.mxu0 %v1579
    %1676 = vmatmul.bf16.gmra.mxu0 %v1473
    %v1677 = vpop.f32.mrf.mxu0
    %v1678 = vadd.f32 %v1479, %v1677
    %v1679 = vpop.f32.mrf.mxu0
    %1680 = vdwg.mxu0
    %1681 = vmatpush.bf16.msra.mxu0 %v1609
    %1682 = vmatpush.bf16.msra.mxu0 %v1607
    %1683 = vmatpush.bf16.msra.mxu0 %v1605
    %1684 = vmatpush.bf16.msra.mxu0 %v1603
    %1685 = vmatpush.bf16.msra.mxu0 %v1601
    %1686 = vmatpush.bf16.msra.mxu0 %v1599
    %1687 = vmatpush.bf16.msra.mxu0 %v1597
    %1688 = vmatpush.bf16.msra.mxu0 %v1595
    %1689 = vmatmul.bf16.gmra.mxu0 %v1474
    %v1690 = vpop.f32.mrf.mxu0
    %v1691 = vadd.f32 %v1678, %v1690
    %v1692 = vpop.f32.mrf.mxu0
    %1693 = vdwg.mxu0
    %v1694 = vmax.f32 %v1665, 0.0
    %v1695 = vmax.f32 %v1691, 0.0
    %v1696 = vld [vmem:[#allocation10] sm:$0xf]
    %v1697 = vld [vmem:[#allocation10 + $0x4] sm:$0xf]
    %v1698 = vld [vmem:[#allocation10 + $0x8] sm:$0xf]
    %v1699 = vld [vmem:[#allocation10 + $0xc] sm:$0xf]
    %v1700 = vld [vmem:[#allocation10 + $0x10] sm:$0xf]
    %v1701 = vld [vmem:[#allocation10 + $0x14] sm:$0xf]
    %v1702 = vld [vmem:[#allocation10 + $0x18] sm:$0xf]
    %v1703 = vld [vmem:[#allocation10 + $0x1c] sm:$0xf]
    %v1704 = vld [vmem:[#allocation10 + $0x20] sm:$0xf]
    %v1705 = vld [vmem:[#allocation10 + $0x24] sm:$0xf]
    %v1706 = vld [vmem:[#allocation10 + $0x28] sm:$0xf]
    %v1707 = vld [vmem:[#allocation10 + $0x2c] sm:$0xf]
    %v1708 = vld [vmem:[#allocation10 + $0x30] sm:$0xf]
    %v1709 = vld [vmem:[#allocation10 + $0x34] sm:$0xf]
    %v1710 = vld [vmem:[#allocation10 + $0x38] sm:$0xf]
    %v1711 = vld [vmem:[#allocation10 + $0x3c] sm:$0xf]
    %v1712 = vld [vmem:[#allocation10 + $0x40] sm:$0xf]
    %v1713 = vld [vmem:[#allocation10 + $0x44] sm:$0xf]
    %v1714 = vld [vmem:[#allocation10 + $0x48] sm:$0xf]
    %v1715 = vld [vmem:[#allocation10 + $0x4c] sm:$0xf]
    %v1716 = vld [vmem:[#allocation10 + $0x50] sm:$0xf]
    %v1717 = vld [vmem:[#allocation10 + $0x54] sm:$0xf]
    %v1718 = vld [vmem:[#allocation10 + $0x58] sm:$0xf]
    %v1719 = vld [vmem:[#allocation10 + $0x5c] sm:$0xf]
    %v1720 = vld [vmem:[#allocation10 + $0x60] sm:$0xf]
    %v1721 = vld [vmem:[#allocation10 + $0x64] sm:$0xf]
    %v1722 = vld [vmem:[#allocation10 + $0x68] sm:$0xf]
    %v1723 = vld [vmem:[#allocation10 + $0x6c] sm:$0xf]
    %v1724 = vld [vmem:[#allocation10 + $0x70] sm:$0xf]
    %v1725 = vld [vmem:[#allocation10 + $0x74] sm:$0xf]
    %v1726 = vld [vmem:[#allocation10 + $0x78] sm:$0xf]
    %v1727 = vld [vmem:[#allocation10 + $0x7c] sm:$0xf]
    %v1728 = vpack.c.bf16 %v1694, %v1694
    %v1729 = vpack.c.bf16 %v1695, %v1695
    %v1730 = vld [vmem:[#allocation16 + $0x4] ss:$0 sm:$0xff]
    %v1763 = vunpack.c.l.b16 %v1696
    %v1764 = vunpack.c.l.b16 %v1697
    %v1765 = vunpack.c.l.b16 %v1698
    %v1766 = vunpack.c.l.b16 %v1699
    %v1767 = vunpack.c.l.b16 %v1700
    %v1768 = vunpack.c.l.b16 %v1701
    %v1769 = vunpack.c.l.b16 %v1702
    %v1770 = vunpack.c.l.b16 %v1703
    %v1771 = vunpack.c.l.b16 %v1704
    %v1772 = vunpack.c.l.b16 %v1705
    %v1773 = vunpack.c.l.b16 %v1706
    %v1774 = vunpack.c.l.b16 %v1707
    %v1775 = vunpack.c.l.b16 %v1708
    %v1776 = vunpack.c.l.b16 %v1709
    %v1777 = vunpack.c.l.b16 %v1710
    %v1778 = vunpack.c.l.b16 %v1711
    %v1779 = vunpack.c.l.b16 %v1712
    %v1780 = vunpack.c.l.b16 %v1713
    %v1781 = vunpack.c.l.b16 %v1714
    %v1782 = vunpack.c.l.b16 %v1715
    %v1783 = vunpack.c.l.b16 %v1716
    %v1784 = vunpack.c.l.b16 %v1717
    %v1785 = vunpack.c.l.b16 %v1718
    %v1786 = vunpack.c.l.b16 %v1719
    %v1787 = vunpack.c.l.b16 %v1720
    %v1788 = vunpack.c.l.b16 %v1721
    %v1789 = vunpack.c.l.b16 %v1722
    %v1790 = vunpack.c.l.b16 %v1723
    %v1791 = vunpack.c.l.b16 %v1724
    %v1792 = vunpack.c.l.b16 %v1725
    %v1793 = vunpack.c.l.b16 %v1726
    %v1794 = vunpack.c.l.b16 %v1727
    %v1795 = vpack.c.b16 %v1764, %v1763
    %v1796 = vpack.c.b16 %v1766, %v1765
    %v1797 = vpack.c.b16 %v1768, %v1767
    %v1798 = vpack.c.b16 %v1770, %v1769
    %v1799 = vpack.c.b16 %v1772, %v1771
    %v1800 = vpack.c.b16 %v1774, %v1773
    %v1801 = vpack.c.b16 %v1776, %v1775
    %v1802 = vpack.c.b16 %v1778, %v1777
    %v1803 = vpack.c.b16 %v1780, %v1779
    %v1804 = vpack.c.b16 %v1782, %v1781
    %v1805 = vpack.c.b16 %v1784, %v1783
    %v1806 = vpack.c.b16 %v1786, %v1785
    %v1807 = vpack.c.b16 %v1788, %v1787
    %v1808 = vpack.c.b16 %v1790, %v1789
    %v1809 = vpack.c.b16 %v1792, %v1791
    %v1810 = vpack.c.b16 %v1794, %v1793
    %1827 = vmatpush.bf16.msra.mxu0 %v1802
    %1828 = vmatpush.bf16.msra.mxu0 %v1801
    %1829 = vmatpush.bf16.msra.mxu0 %v1800
    %1830 = vmatpush.bf16.msra.mxu0 %v1799
    %1831 = vmatpush.bf16.msra.mxu0 %v1798
    %1832 = vmatpush.bf16.msra.mxu0 %v1797
    %1833 = vmatpush.bf16.msra.mxu0 %v1796
    %1834 = vmatpush.bf16.msra.mxu0 %v1795
    %1835 = vmatmul.bf16.gmra.mxu0 %v1728
    %v1836 = vpop.f32.mrf.mxu0
    %v1837 = vadd.f32 %v1730, %v1836
    %v1838 = vpop.f32.mrf.mxu0
    %1839 = vdwg.mxu0
    %1840 = vmatpush.bf16.msra.mxu0 %v1810
    %1841 = vmatpush.bf16.msra.mxu0 %v1809
    %1842 = vmatpush.bf16.msra.mxu0 %v1808
    %1843 = vmatpush.bf16.msra.mxu0 %v1807
    %1844 = vmatpush.bf16.msra.mxu0 %v1806
    %1845 = vmatpush.bf16.msra.mxu0 %v1805
    %1846 = vmatpush.bf16.msra.mxu0 %v1804
    %1847 = vmatpush.bf16.msra.mxu0 %v1803
    %1848 = vmatmul.bf16.gmra.mxu0 %v1729
    %v1849 = vpop.f32.mrf.mxu0
    %v1850 = vadd.f32 %v1837, %v1849
    %v1851 = vpop.f32.mrf.mxu0
    %1852 = vdwg.mxu0
    %v1853 = vmax.f32 %v1850, 0.0
    %v1854 = vld [vmem:[#allocation11] sm:$0xf]
    %v1855 = vld [vmem:[#allocation11 + $0x4] sm:$0xf]
    %v1856 = vld [vmem:[#allocation11 + $0x8] sm:$0xf]
    %v1857 = vld [vmem:[#allocation11 + $0xc] sm:$0xf]
    %v1858 = vld [vmem:[#allocation11 + $0x10] sm:$0xf]
    %v1859 = vld [vmem:[#allocation11 + $0x14] sm:$0xf]
    %v1860 = vld [vmem:[#allocation11 + $0x18] sm:$0xf]
    %v1861 = vld [vmem:[#allocation11 + $0x1c] sm:$0xf]
    %v1862 = vld [vmem:[#allocation11 + $0x20] sm:$0xf]
    %v1863 = vld [vmem:[#allocation11 + $0x24] sm:$0xf]
    %v1864 = vld [vmem:[#allocation11 + $0x28] sm:$0xf]
    %v1865 = vld [vmem:[#allocation11 + $0x2c] sm:$0xf]
    %v1866 = vld [vmem:[#allocation11 + $0x30] sm:$0xf]
    %v1867 = vld [vmem:[#allocation11 + $0x34] sm:$0xf]
    %v1868 = vld [vmem:[#allocation11 + $0x38] sm:$0xf]
    %v1869 = vld [vmem:[#allocation11 + $0x3c] sm:$0xf]
    %v1870 = vpack.c.bf16 %v1853, %v1853
    %v1871 = vld [vmem:[#allocation16 + $0x5] ss:$0 sm:$0xff]
    %v1888 = vunpack.c.l.b16 %v1854
    %v1889 = vunpack.c.l.b16 %v1855
    %v1890 = vunpack.c.l.b16 %v1856
    %v1891 = vunpack.c.l.b16 %v1857
    %v1892 = vunpack.c.l.b16 %v1858
    %v1893 = vunpack.c.l.b16 %v1859
    %v1894 = vunpack.c.l.b16 %v1860
    %v1895 = vunpack.c.l.b16 %v1861
    %v1896 = vunpack.c.l.b16 %v1862
    %v1897 = vunpack.c.l.b16 %v1863
    %v1898 = vunpack.c.l.b16 %v1864
    %v1899 = vunpack.c.l.b16 %v1865
    %v1900 = vunpack.c.l.b16 %v1866
    %v1901 = vunpack.c.l.b16 %v1867
    %v1902 = vunpack.c.l.b16 %v1868
    %v1903 = vunpack.c.l.b16 %v1869
    %v1904 = vpack.c.b16 %v1889, %v1888
    %v1905 = vpack.c.b16 %v1891, %v1890
    %v1906 = vpack.c.b16 %v1893, %v1892
    %v1907 = vpack.c.b16 %v1895, %v1894
    %v1908 = vpack.c.b16 %v1897, %v1896
    %v1909 = vpack.c.b16 %v1899, %v1898
    %v1910 = vpack.c.b16 %v1901, %v1900
    %v1911 = vpack.c.b16 %v1903, %v1902
    %1920 = vmatpush.bf16.msra.mxu0 %v1911
    %1921 = vmatpush.bf16.msra.mxu0 %v1910
    %1922 = vmatpush.bf16.msra.mxu0 %v1909
    %1923 = vmatpush.bf16.msra.mxu0 %v1908
    %1924 = vmatpush.bf16.msra.mxu0 %v1907
    %1925 = vmatpush.bf16.msra.mxu0 %v1906
    %1926 = vmatpush.bf16.msra.mxu0 %v1905
    %1927 = vmatpush.bf16.msra.mxu0 %v1904
    %1928 = vmatmul.bf16.gmra.mxu0 %v1870
    %v1929 = vpop.f32.mrf.mxu0
    %v1930 = vadd.f32 %v1871, %v1929
    %v1931 = vpop.f32.mrf.mxu0
    %1932 = vdwg.mxu0
    %v1933 = vmax.f32 %v1930, 0.0
    %v1934 = vld [vmem:[#allocation13] sm:$0xf]
    %v1935 = vld [vmem:[#allocation13 + $0x4] sm:$0xf]
    %v1936 = vld [vmem:[#allocation13 + $0x8] sm:$0xf]
    %v1937 = vld [vmem:[#allocation13 + $0xc] sm:$0xf]
    %v1938 = vld [vmem:[#allocation13 + $0x10] sm:$0xf]
    %v1939 = vld [vmem:[#allocation13 + $0x14] sm:$0xf]
    %v1940 = vld [vmem:[#allocation13 + $0x18] sm:$0xf]
    %v1941 = vld [vmem:[#allocation13 + $0x1c] sm:$0xf]
    %v1942 = vld [vmem:[#allocation13 + $0x20] sm:$0xf]
    %v1943 = vld [vmem:[#allocation13 + $0x24] sm:$0xf]
    %v1944 = vld [vmem:[#allocation13 + $0x28] sm:$0xf]
    %v1945 = vld [vmem:[#allocation13 + $0x2c] sm:$0xf]
    %v1946 = vld [vmem:[#allocation13 + $0x30] sm:$0xf]
    %v1947 = vld [vmem:[#allocation13 + $0x34] sm:$0xf]
    %v1948 = vld [vmem:[#allocation13 + $0x38] sm:$0xf]
    %v1949 = vld [vmem:[#allocation13 + $0x3c] sm:$0xf]
    %v1950 = vpack.c.bf16 %v1933, %v1933
    %v1951 = vld [vmem:[#allocation16 + $0x6] ss:$0 sm:$0xff]
    %v1968 = vunpack.c.l.b16 %v1934
    %v1969 = vunpack.c.l.b16 %v1935
    %v1970 = vunpack.c.l.b16 %v1936
    %v1971 = vunpack.c.l.b16 %v1937
    %v1972 = vunpack.c.l.b16 %v1938
    %v1973 = vunpack.c.l.b16 %v1939
    %v1974 = vunpack.c.l.b16 %v1940
    %v1975 = vunpack.c.l.b16 %v1941
    %v1976 = vunpack.c.l.b16 %v1942
    %v1977 = vunpack.c.l.b16 %v1943
    %v1978 = vunpack.c.l.b16 %v1944
    %v1979 = vunpack.c.l.b16 %v1945
    %v1980 = vunpack.c.l.b16 %v1946
    %v1981 = vunpack.c.l.b16 %v1947
    %v1982 = vunpack.c.l.b16 %v1948
    %v1983 = vunpack.c.l.b16 %v1949
    %v1984 = vpack.c.b16 %v1969, %v1968
    %v1985 = vpack.c.b16 %v1971, %v1970
    %v1986 = vpack.c.b16 %v1973, %v1972
    %v1987 = vpack.c.b16 %v1975, %v1974
    %v1988 = vpack.c.b16 %v1977, %v1976
    %v1989 = vpack.c.b16 %v1979, %v1978
    %v1990 = vpack.c.b16 %v1981, %v1980
    %v1991 = vpack.c.b16 %v1983, %v1982
    %2000 = vmatpush.bf16.msra.mxu0 %v1991
    %2001 = vmatpush.bf16.msra.mxu0 %v1990
    %2002 = vmatpush.bf16.msra.mxu0 %v1989
    %2003 = vmatpush.bf16.msra.mxu0 %v1988
    %2004 = vmatpush.bf16.msra.mxu0 %v1987
    %2005 = vmatpush.bf16.msra.mxu0 %v1986
    %2006 = vmatpush.bf16.msra.mxu0 %v1985
    %2007 = vmatpush.bf16.msra.mxu0 %v1984
    %2008 = vmatmul.bf16.gmra.mxu0 %v1950
    %v2009 = vpop.f32.mrf.mxu0
    %v2010 = vadd.f32 %v1951, %v2009
    %v2011 = vpop.f32.mrf.mxu0
    %2012 = vdwg.mxu0
    %v2013 = vmax.f32 %v2010, 0.0
    %v2014 = vld [vmem:[#allocation14] sm:$0xf]
    %v2015 = vld [vmem:[#allocation14 + $0x4] sm:$0xf]
    %v2016 = vld [vmem:[#allocation14 + $0x8] sm:$0xf]
    %v2017 = vld [vmem:[#allocation14 + $0xc] sm:$0xf]
    %v2018 = vld [vmem:[#allocation14 + $0x10] sm:$0xf]
    %v2019 = vld [vmem:[#allocation14 + $0x14] sm:$0xf]
    %v2020 = vld [vmem:[#allocation14 + $0x18] sm:$0xf]
    %v2021 = vld [vmem:[#allocation14 + $0x1c] sm:$0xf]
    %v2022 = vld [vmem:[#allocation14 + $0x20] sm:$0xf]
    %v2023 = vld [vmem:[#allocation14 + $0x24] sm:$0xf]
    %v2024 = vld [vmem:[#allocation14 + $0x28] sm:$0xf]
    %v2025 = vld [vmem:[#allocation14 + $0x2c] sm:$0xf]
    %v2026 = vld [vmem:[#allocation14 + $0x30] sm:$0xf]
    %v2027 = vld [vmem:[#allocation14 + $0x34] sm:$0xf]
    %v2028 = vld [vmem:[#allocation14 + $0x38] sm:$0xf]
    %v2029 = vld [vmem:[#allocation14 + $0x3c] sm:$0xf]
    %v2030 = vpack.c.bf16 %v2013, %v2013
    %v2031 = vld [vmem:[#allocation16 + $0x7] ss:$0 sm:$0xff]
    %v2048 = vunpack.c.l.b16 %v2014
    %v2049 = vunpack.c.l.b16 %v2015
    %v2050 = vunpack.c.l.b16 %v2016
    %v2051 = vunpack.c.l.b16 %v2017
    %v2052 = vunpack.c.l.b16 %v2018
    %v2053 = vunpack.c.l.b16 %v2019
    %v2054 = vunpack.c.l.b16 %v2020
    %v2055 = vunpack.c.l.b16 %v2021
    %v2056 = vunpack.c.l.b16 %v2022
    %v2057 = vunpack.c.l.b16 %v2023
    %v2058 = vunpack.c.l.b16 %v2024
    %v2059 = vunpack.c.l.b16 %v2025
    %v2060 = vunpack.c.l.b16 %v2026
    %v2061 = vunpack.c.l.b16 %v2027
    %v2062 = vunpack.c.l.b16 %v2028
    %v2063 = vunpack.c.l.b16 %v2029
    %v2064 = vpack.c.b16 %v2049, %v2048
    %v2065 = vpack.c.b16 %v2051, %v2050
    %v2066 = vpack.c.b16 %v2053, %v2052
    %v2067 = vpack.c.b16 %v2055, %v2054
    %v2068 = vpack.c.b16 %v2057, %v2056
    %v2069 = vpack.c.b16 %v2059, %v2058
    %v2070 = vpack.c.b16 %v2061, %v2060
    %v2071 = vpack.c.b16 %v2063, %v2062
    %2080 = vmatpush.bf16.msra.mxu0 %v2071
    %2081 = vmatpush.bf16.msra.mxu0 %v2070
    %2082 = vmatpush.bf16.msra.mxu0 %v2069
    %2083 = vmatpush.bf16.msra.mxu0 %v2068
    %2084 = vmatpush.bf16.msra.mxu0 %v2067
    %2085 = vmatpush.bf16.msra.mxu0 %v2066
    %2086 = vmatpush.bf16.msra.mxu0 %v2065
    %2087 = vmatpush.bf16.msra.mxu0 %v2064
    %2088 = vmatmul.bf16.gmra.mxu0 %v2030
    %v2089 = vpop.f32.mrf.mxu0
    %v2090 = vadd.f32 %v2031, %v2089
    %v2091 = vpop.f32.mrf.mxu0
    %2092 = vdwg.mxu0
    %2093 = vst [vmem:[#allocation17] sm:$0x3] %v2090
    // Predicated region
    $region78: #{linear_encoder_forward.1} parent=1 // pred_check
      _
    $region79: #{linear_encoder_forward.1} parent=1 // pred_check_branch
      %2095 = sbr.rel (0) target = $region81
    $region80: #{linear_encoder_forward.1} parent=1 // pred_region
      %2097 = vsyncadd [#allocation4], 0
      %s2099 = sshll.u32 [#allocation17], 4
      %s2100 = int_to_ptr.vmem [resolvable:$true] %s2099
      %s2101 = sshll.u32 %s10, 4
      %s2102 = int_to_ptr.hbm [resolvable:$true] %s2101
      %2104 = dma.vmem_to_hbm [thread:$0]  %s2100, 32, %s2102, [#allocation4]
    $region81: #{linear_encoder_forward.1} parent=1 // pred_fallthru
      _
    // Predicated region
    $region82: #{linear_encoder_forward.1} parent=1 // pred_check
      _
    $region83: #{linear_encoder_forward.1} parent=1 // pred_check_branch
      %2106 = sbr.rel (0) target = $region85
    $region84: #{linear_encoder_forward.1} parent=1 // pred_region
      %2108 = dma.done [#allocation4], 32
    $region85: #{linear_encoder_forward.1} parent=1 // pred_fallthru
      _
    %2109 = vsyncpa [#allocation3], 1
    %2110 = vsyncpa [#allocation6], 1
    %2111 = vsyncpa [#allocation9], 1
    %2112 = vsyncpa [#allocation12], 1
    %2113 = vsyncpa [#allocation15], 1
    %2114 = vsyncpa [#allocation4], 1

</llo_original>
